<compile_context>
chip_gen: v7x
topology: tpu7x:2x2x1
jax: 0.10.0
libtpu: 0.0.40
codegen_flags: <defaults>
</compile_context>

<pallas_src>
import functools

import jax
import jax.numpy as jnp
from jax import lax
from jax.experimental import pallas as pl
from jax.experimental.pallas import tpu as pltpu


def _round_up(x, m):
    return ((x + m - 1) // m) * m


def _divisor_tiles(total, align, target):
    """Multiples of `align` dividing `total`, descending, capped at `target`."""
    cands = [t for t in range(align, total + 1, align)
             if total % t == 0 and t <= max(target, align)]
    return sorted(cands, reverse=True) if cands else [min(align, total)]


def _largest_divisor_tile(total, align, cap):
    """Largest multiple of `align` that divides `total` and is <= cap (>= align)."""
    best = align
    t = align
    while t <= min(total, max(cap, align)):
        if total % t == 0:
            best = t
        t += align
    return best


def _vmem_budget_bytes():
    """Per-generation VMEM budget for tile sizing (conservative default = v7x)."""
    cap = 64 * 1024 * 1024
    try:
        info = pltpu.get_tpu_info()
        cap = int(getattr(info, "vmem_capacity_bytes", cap))
    except Exception:
        pass
    # Leave headroom for compiler scratch; use up to ~100 MiB on 128-MiB parts
    # (v5e/v6e) and ~56 MiB on 64-MiB parts (v7x).
    return int(min(max(cap - 8 * 1024 * 1024, 32 * 1024 * 1024),
                   100 * 1024 * 1024))


# ----------------------------- glue: im2col ------------------------------- #
def unfold_nchw_pbl(x, kernel_size, stride=1, padding=0, dilation=1):
    """torch.nn.Unfold equivalent, emitted P-major: (B,C,H,W) -> (P, B, L)."""
    kh, kw = kernel_size
    if padding:
        x = jnp.pad(x, ((0, 0), (0, 0), (padding, padding), (padding, padding)))
    B, C, H, W = x.shape
    h_out = (H - dilation * (kh - 1) - 1) // stride + 1
    w_out = (W - dilation * (kw - 1) - 1) // stride + 1
    taps = []
    for i in range(kh):
        for j in range(kw):
            patch = x[
                :, :,
                i * dilation: i * dilation + stride * (h_out - 1) + 1: stride,
                j * dilation: j * dilation + stride * (w_out - 1) + 1: stride,
            ]
            taps.append(patch.reshape(B, C, h_out * w_out))
    cols = jnp.stack(taps, axis=0)          # (Kh*Kw, B, C, L)
    cols = cols.transpose(2, 0, 1, 3)       # (C, Kh*Kw, B, L)
    # torch unfold ordering: p = c*(Kh*Kw) + i*Kw + j
    return cols.reshape(C * kh * kw, B, h_out * w_out), (h_out, w_out)


# ------------------------------ Pallas kernel ------------------------------ #
def _rrf2d_kernel(p_ref, w_ref, b_ref, o_ref, *, group, lane_slab, p_unroll):
    # p_ref: (P, B, TL)  w_ref: (P, TC, TL)  b_ref: (TC, TL)  o_ref: (B, TC, TL)
    P, B, TL = p_ref.shape
    TC = w_ref.shape[1]
    for c0 in range(0, TC, group):
        for l0 in range(0, TL, lane_slab):
            G, TS = group, lane_slab
            # Accumulator starts as the bias (bias add hoisted out of the P
            # loop) and is small enough (<= ~32 KiB) to live entirely in vregs.
            acc0 = jnp.broadcast_to(
                b_ref[c0:c0 + G, l0:l0 + TS].astype(jnp.float32)[None],
                (B, G, TS))

            def body(p_idx, acc):
                # Leading-dim indexing -> contiguous (sublane, lane) planes,
                # no cross-sublane shuffles per P step.
                p_row = p_ref[p_idx, :, l0:l0 + TS].astype(jnp.float32)          # (B, TS)
                w_row = w_ref[p_idx, c0:c0 + G, l0:l0 + TS].astype(jnp.float32)  # (G, TS)
                return acc + p_row[:, None, :] * w_row[None, :, :]

            acc = lax.fori_loop(0, P, body, acc0, unroll=p_unroll)
            o_ref[:, c0:c0 + G, l0:l0 + TS] = acc.astype(o_ref.dtype)


def _pick_tiles(B, P, C_pad, L_pad, bpe_p, bpe_w, bpe_b, budget,
                tc_target, tl_target):
    tl_cands = _divisor_tiles(L_pad, 128, tl_target)
    tc_cands = _divisor_tiles(C_pad, 8, tc_target)
    can_split = (L_pad // 128) * (C_pad // 8) >= 2

    def tile_bytes(tc, tl):
        return (bpe_p * P * B * tl          # patches tile
                + bpe_w * P * tc * tl       # weights tile (dominant stream)
                + bpe_b * tc * tl           # bias tile
                + 4 * B * tc * tl)          # f32 output tile

    for tl in tl_cands:
        for tc in tc_cands:
            if 2 * tile_bytes(tc, tl) > budget:       # double-buffered footprint
                continue
            # Keep >= 2 grid blocks so a v7x second TensorCore gets work.
            if can_split and (L_pad // tl) * (C_pad // tc) == 1:
                continue
            return tc, tl
    return tc_cands[-1], tl_cands[-1]


def rrf2d_pallas(patches_pbl, weights_pcl, biases_cl, c_out, l_out,
                 *, tc_target=64, tl_target=1024):
    """patches (P,B,L), weights (P,C_pad,L_pad), biases (C_pad,L_pad) -> (B,c_out,l_out)."""
    P, B, L = patches_pbl.shape
    _, C_pad, L_pad = weights_pcl.shape

    budget = _vmem_budget_bytes()
    bpe_p = jnp.dtype(patches_pbl.dtype).itemsize
    bpe_w = jnp.dtype(weights_pcl.dtype).itemsize
    bpe_b = jnp.dtype(biases_cl.dtype).itemsize
    TC, TL = _pick_tiles(B, P, C_pad, L_pad, bpe_p, bpe_w, bpe_b, budget,
                         tc_target, tl_target)

    # Only the (small) patches array is padded per call; weights/biases were
    # pre-padded once at init.
    if L_pad != L:
        patches_pbl = jnp.pad(patches_pbl, ((0, 0), (0, 0), (0, L_pad - L)))

    # In-kernel blocking of the accumulator: 8 output channels x a lane slab
    # chosen so the live f32 acc stays <= ~32 KiB of vregs.
    group = 8
    slab_cap = max(128, (32 * 1024 // (4 * group * B)) // 128 * 128)
    lane_slab = _largest_divisor_tile(TL, 128, slab_cap)
    p_unroll = True if P <= 64 else 8

    # Grid: L outer, C inner -> patches block index constant across the whole
    # C sweep, so its DMA is issued once per L tile, not per (L, C) step.
    grid = (L_pad // TL, C_pad // TC)

    tile = (bpe_p * P * B * TL + bpe_w * P * TC * TL + bpe_b * TC * TL
            + 4 * B * TC * TL)
    vmem_limit = int(min(budget, max(32 * 1024 * 1024, 2 * tile + (8 << 20))))

    kernel = functools.partial(_rrf2d_kernel, group=group,
                               lane_slab=lane_slab, p_unroll=p_unroll)

    out = pl.pallas_call(
        kernel,
        out_shape=jax.ShapeDtypeStruct((B, C_pad, L_pad), jnp.float32),
        grid=grid,
        in_specs=[
            pl.BlockSpec((P, B, TL), lambda l, c: (0, 0, l)),
            pl.BlockSpec((P, TC, TL), lambda l, c: (0, c, l)),
            pl.BlockSpec((TC, TL), lambda l, c: (c, l)),
        ],
        out_specs=pl.BlockSpec((B, TC, TL), lambda l, c: (0, c, l)),
        compiler_params=pltpu.CompilerParams(
            dimension_semantics=("parallel", "parallel"),
            vmem_limit_bytes=vmem_limit),
    )(patches_pbl, weights_pcl, biases_cl)
    return out[:, :c_out, :l_out]


# ------------------------------- full module ------------------------------- #
class RRF2dPallas:
    def __init__(self, input_size, in_channels, out_channels, kernel_size,
                 stride=1, padding=0, dilation=1, bias=True, key=None,
                 param_dtype=jnp.float32):
        self.K = ((kernel_size, kernel_size) if isinstance(kernel_size, int)
                  else tuple(kernel_size))
        self.stride, self.padding, self.dilation = stride, padding, dilation
        self.C_in, self.C_out = in_channels, out_channels
        kh, kw = self.K
        h_out = (input_size[0] + 2 * padding - dilation * (kh - 1) - 1) // stride + 1
        w_out = (input_size[1] + 2 * padding - dilation * (kw - 1) - 1) // stride + 1
        self.S_out = (h_out, w_out)
        self.L = h_out * w_out
        self.P = in_channels * kh * kw

        key = jax.random.PRNGKey(42) if key is None else key
        kw_, kb_ = jax.random.split(key)
        # torch.rand -> uniform [0, 1). Keep a PyTorch-layout copy for reference;
        # the kernel-facing copy is transposed to (P, C, L) and padded ONCE here
        # so no per-call weight copy goes through HBM.
        self.weights = jax.random.uniform(
            kw_, (out_channels, self.P, self.L), jnp.float32)
        self.biases = (jax.random.uniform(kb_, (out_channels, self.L), jnp.float32)
                       if bias else jnp.zeros((out_channels, self.L), jnp.float32))

        self.C_pad = _round_up(out_channels, 8)
        self.L_pad = _round_up(self.L, 128)
        w_pcl = jnp.transpose(self.weights, (1, 0, 2))            # (P, C_out, L)
        w_pcl = jnp.pad(w_pcl, ((0, 0), (0, self.C_pad - out_channels),
                                (0, self.L_pad - self.L)))
        b_cl = jnp.pad(self.biases, ((0, self.C_pad - out_channels),
                                     (0, self.L_pad - self.L)))
        # param_dtype=jnp.bfloat16 halves the dominant weight HBM stream on
        # v6e/v7x; the kernel accumulates in f32 regardless.
        self.w_kernel = w_pcl.astype(param_dtype)
        self.b_kernel = b_cl.astype(param_dtype)

    def __call__(self, x):
        # x: (B, C_in, H, W)  NCHW, same as PyTorch.
        # TODO(synk): fuse the im2col into the kernel (per-tap rectangular
        # windows of x as BlockSpec index_maps) to drop the HBM-materialized
        # patches array.
        patches, (h_out, w_out) = unfold_nchw_pbl(
            x, self.K, self.stride, self.padding, self.dilation)
        y = rrf2d_pallas(patches, self.w_kernel, self.b_kernel,
                         self.C_out, self.L)                       # (B, C_out, L)
        # Fold with kernel (1,1) == reshape L -> (H_out, W_out)
        return y.reshape(x.shape[0], self.C_out, h_out, w_out)


# --------------------------------- driver ---------------------------------- #
if __name__ == "__main__":
    key = jax.random.PRNGKey(0)
    kx, kparams = jax.random.split(key)

    B, C_in, H, W = 2, 4, 16, 16
    C_out, ksize = 8, 3

    x = jax.random.normal(kx, (B, C_in, H, W), jnp.float32)
    mod = RRF2dPallas(input_size=(H, W), in_channels=C_in, out_channels=C_out,
                      kernel_size=ksize, stride=1, padding=0, dilation=1,
                      bias=True, key=kparams)

    out = mod(x)
    out = jax.block_until_ready(out)

    # Pure-JAX reference of the same math (correctness sanity check).
    patches, (ho, wo) = unfold_nchw_pbl(x, mod.K, mod.stride, mod.padding,
                                        mod.dilation)                # (P, B, L)
    ref = (jnp.einsum("pbl,opl->bol", patches, mod.weights)
           + mod.biases[None]).reshape(B, C_out, ho, wo)

    assert out.shape == (B, C_out, H - ksize + 1, W - ksize + 1), out.shape
    assert jnp.allclose(out, ref, atol=1e-4, rtol=1e-4)

    print("KERNEL_OK")
</pallas_src>

<mosaic_0001>
module attributes {stable_mosaic.version = 11 : i64} {
  func.func @_rrf2d_kernel(%arg0: i32, %arg1: i32, %arg2: memref<36x2x128xf32, #tpu.memory_space<vmem>>, %arg3: memref<36x8x128xf32, #tpu.memory_space<vmem>>, %arg4: memref<8x128xf32, #tpu.memory_space<vmem>>, %arg5: memref<2x8x128xf32, #tpu.memory_space<vmem>>) attributes {dimension_semantics = [#tpu.dimension_semantics<parallel>, #tpu.dimension_semantics<parallel>], iteration_bounds = array<i64: 2, 1>, scalar_prefetch = 0 : i64, scratch_operands = 0 : i64, tpu.core_type = #tpu.core_type<tc>, window_params = [{transform_indices = @transform_0, window_bounds = array<i64: 36, 2, 128>}, {transform_indices = @transform_1, window_bounds = array<i64: 36, 8, 128>}, {transform_indices = @transform_2, window_bounds = array<i64: 8, 128>}, {transform_indices = @transform_3, window_bounds = array<i64: 2, 8, 128>}]} {
    %c0 = arith.constant 0 : index
    %c0_0 = arith.constant 0 : index
    %0 = vector.load %arg4[%c0, %c0_0] : memref<8x128xf32, #tpu.memory_space<vmem>>, vector<8x128xf32>
    %1 = vector.shape_cast %0 : vector<8x128xf32> to vector<1x8x128xf32>
    %2 = vector.shape_cast %1 : vector<1x8x128xf32> to vector<1x8x128xf32>
    %3 = vector.broadcast %2 : vector<1x8x128xf32> to vector<2x8x128xf32>
    %c0_i32 = arith.constant 0 : i32
    %4 = arith.index_cast %c0_i32 : i32 to index
    %c0_1 = arith.constant 0 : index
    %c0_2 = arith.constant 0 : index
    %5 = vector.load %arg2[%4, %c0_1, %c0_2] : memref<36x2x128xf32, #tpu.memory_space<vmem>>, vector<1x2x128xf32>
    %6 = vector.shape_cast %5 : vector<1x2x128xf32> to vector<2x128xf32>
    %7 = arith.index_cast %c0_i32 : i32 to index
    %c0_3 = arith.constant 0 : index
    %c0_4 = arith.constant 0 : index
    %8 = vector.load %arg3[%7, %c0_3, %c0_4] : memref<36x8x128xf32, #tpu.memory_space<vmem>>, vector<1x8x128xf32>
    %9 = vector.shape_cast %8 : vector<1x8x128xf32> to vector<8x128xf32>
    %10 = vector.shape_cast %6 : vector<2x128xf32> to vector<2x1x128xf32>
    %11 = vector.shape_cast %9 : vector<8x128xf32> to vector<1x8x128xf32>
    %12 = vector.broadcast %10 : vector<2x1x128xf32> to vector<2x8x128xf32>
    %13 = vector.broadcast %11 : vector<1x8x128xf32> to vector<2x8x128xf32>
    %14 = arith.mulf %12, %13 : vector<2x8x128xf32>
    %15 = arith.addf %3, %14 : vector<2x8x128xf32>
    %c1_i32 = arith.constant 1 : i32
    %16 = arith.index_cast %c1_i32 : i32 to index
    %c0_5 = arith.constant 0 : index
    %c0_6 = arith.constant 0 : index
    %17 = vector.load %arg2[%16, %c0_5, %c0_6] : memref<36x2x128xf32, #tpu.memory_space<vmem>>, vector<1x2x128xf32>
    %18 = vector.shape_cast %17 : vector<1x2x128xf32> to vector<2x128xf32>
    %19 = arith.index_cast %c1_i32 : i32 to index
    %c0_7 = arith.constant 0 : index
    %c0_8 = arith.constant 0 : index
    %20 = vector.load %arg3[%19, %c0_7, %c0_8] : memref<36x8x128xf32, #tpu.memory_space<vmem>>, vector<1x8x128xf32>
    %21 = vector.shape_cast %20 : vector<1x8x128xf32> to vector<8x128xf32>
    %22 = vector.shape_cast %18 : vector<2x128xf32> to vector<2x1x128xf32>
    %23 = vector.shape_cast %21 : vector<8x128xf32> to vector<1x8x128xf32>
    %24 = vector.broadcast %22 : vector<2x1x128xf32> to vector<2x8x128xf32>
    %25 = vector.broadcast %23 : vector<1x8x128xf32> to vector<2x8x128xf32>
    %26 = arith.mulf %24, %25 : vector<2x8x128xf32>
    %27 = arith.addf %15, %26 : vector<2x8x128xf32>
    %c2_i32 = arith.constant 2 : i32
    %28 = arith.index_cast %c2_i32 : i32 to index
    %c0_9 = arith.constant 0 : index
    %c0_10 = arith.constant 0 : index
    %29 = vector.load %arg2[%28, %c0_9, %c0_10] : memref<36x2x128xf32, #tpu.memory_space<vmem>>, vector<1x2x128xf32>
    %30 = vector.shape_cast %29 : vector<1x2x128xf32> to vector<2x128xf32>
    %31 = arith.index_cast %c2_i32 : i32 to index
    %c0_11 = arith.constant 0 : index
    %c0_12 = arith.constant 0 : index
    %32 = vector.load %arg3[%31, %c0_11, %c0_12] : memref<36x8x128xf32, #tpu.memory_space<vmem>>, vector<1x8x128xf32>
    %33 = vector.shape_cast %32 : vector<1x8x128xf32> to vector<8x128xf32>
    %34 = vector.shape_cast %30 : vector<2x128xf32> to vector<2x1x128xf32>
    %35 = vector.shape_cast %33 : vector<8x128xf32> to vector<1x8x128xf32>
    %36 = vector.broadcast %34 : vector<2x1x128xf32> to vector<2x8x128xf32>
    %37 = vector.broadcast %35 : vector<1x8x128xf32> to vector<2x8x128xf32>
    %38 = arith.mulf %36, %37 : vector<2x8x128xf32>
    %39 = arith.addf %27, %38 : vector<2x8x128xf32>
    %c3_i32 = arith.constant 3 : i32
    %40 = arith.index_cast %c3_i32 : i32 to index
    %c0_13 = arith.constant 0 : index
    %c0_14 = arith.constant 0 : index
    %41 = vector.load %arg2[%40, %c0_13, %c0_14] : memref<36x2x128xf32, #tpu.memory_space<vmem>>, vector<1x2x128xf32>
    %42 = vector.shape_cast %41 : vector<1x2x128xf32> to vector<2x128xf32>
    %43 = arith.index_cast %c3_i32 : i32 to index
    %c0_15 = arith.constant 0 : index
    %c0_16 = arith.constant 0 : index
    %44 = vector.load %arg3[%43, %c0_15, %c0_16] : memref<36x8x128xf32, #tpu.memory_space<vmem>>, vector<1x8x128xf32>
    %45 = vector.shape_cast %44 : vector<1x8x128xf32> to vector<8x128xf32>
    %46 = vector.shape_cast %42 : vector<2x128xf32> to vector<2x1x128xf32>
    %47 = vector.shape_cast %45 : vector<8x128xf32> to vector<1x8x128xf32>
    %48 = vector.broadcast %46 : vector<2x1x128xf32> to vector<2x8x128xf32>
    %49 = vector.broadcast %47 : vector<1x8x128xf32> to vector<2x8x128xf32>
    %50 = arith.mulf %48, %49 : vector<2x8x128xf32>
    %51 = arith.addf %39, %50 : vector<2x8x128xf32>
    %c4_i32 = arith.constant 4 : i32
    %52 = arith.index_cast %c4_i32 : i32 to index
    %c0_17 = arith.constant 0 : index
    %c0_18 = arith.constant 0 : index
    %53 = vector.load %arg2[%52, %c0_17, %c0_18] : memref<36x2x128xf32, #tpu.memory_space<vmem>>, vector<1x2x128xf32>
    %54 = vector.shape_cast %53 : vector<1x2x128xf32> to vector<2x128xf32>
    %55 = arith.index_cast %c4_i32 : i32 to index
    %c0_19 = arith.constant 0 : index
    %c0_20 = arith.constant 0 : index
    %56 = vector.load %arg3[%55, %c0_19, %c0_20] : memref<36x8x128xf32, #tpu.memory_space<vmem>>, vector<1x8x128xf32>
    %57 = vector.shape_cast %56 : vector<1x8x128xf32> to vector<8x128xf32>
    %58 = vector.shape_cast %54 : vector<2x128xf32> to vector<2x1x128xf32>
    %59 = vector.shape_cast %57 : vector<8x128xf32> to vector<1x8x128xf32>
    %60 = vector.broadcast %58 : vector<2x1x128xf32> to vector<2x8x128xf32>
    %61 = vector.broadcast %59 : vector<1x8x128xf32> to vector<2x8x128xf32>
    %62 = arith.mulf %60, %61 : vector<2x8x128xf32>
    %63 = arith.addf %51, %62 : vector<2x8x128xf32>
    %c5_i32 = arith.constant 5 : i32
    %64 = arith.index_cast %c5_i32 : i32 to index
    %c0_21 = arith.constant 0 : index
    %c0_22 = arith.constant 0 : index
    %65 = vector.load %arg2[%64, %c0_21, %c0_22] : memref<36x2x128xf32, #tpu.memory_space<vmem>>, vector<1x2x128xf32>
    %66 = vector.shape_cast %65 : vector<1x2x128xf32> to vector<2x128xf32>
    %67 = arith.index_cast %c5_i32 : i32 to index
    %c0_23 = arith.constant 0 : index
    %c0_24 = arith.constant 0 : index
    %68 = vector.load %arg3[%67, %c0_23, %c0_24] : memref<36x8x128xf32, #tpu.memory_space<vmem>>, vector<1x8x128xf32>
    %69 = vector.shape_cast %68 : vector<1x8x128xf32> to vector<8x128xf32>
    %70 = vector.shape_cast %66 : vector<2x128xf32> to vector<2x1x128xf32>
    %71 = vector.shape_cast %69 : vector<8x128xf32> to vector<1x8x128xf32>
    %72 = vector.broadcast %70 : vector<2x1x128xf32> to vector<2x8x128xf32>
    %73 = vector.broadcast %71 : vector<1x8x128xf32> to vector<2x8x128xf32>
    %74 = arith.mulf %72, %73 : vector<2x8x128xf32>
    %75 = arith.addf %63, %74 : vector<2x8x128xf32>
    %c6_i32 = arith.constant 6 : i32
    %76 = arith.index_cast %c6_i32 : i32 to index
    %c0_25 = arith.constant 0 : index
    %c0_26 = arith.constant 0 : index
    %77 = vector.load %arg2[%76, %c0_25, %c0_26] : memref<36x2x128xf32, #tpu.memory_space<vmem>>, vector<1x2x128xf32>
    %78 = vector.shape_cast %77 : vector<1x2x128xf32> to vector<2x128xf32>
    %79 = arith.index_cast %c6_i32 : i32 to index
    %c0_27 = arith.constant 0 : index
    %c0_28 = arith.constant 0 : index
    %80 = vector.load %arg3[%79, %c0_27, %c0_28] : memref<36x8x128xf32, #tpu.memory_space<vmem>>, vector<1x8x128xf32>
    %81 = vector.shape_cast %80 : vector<1x8x128xf32> to vector<8x128xf32>
    %82 = vector.shape_cast %78 : vector<2x128xf32> to vector<2x1x128xf32>
    %83 = vector.shape_cast %81 : vector<8x128xf32> to vector<1x8x128xf32>
    %84 = vector.broadcast %82 : vector<2x1x128xf32> to vector<2x8x128xf32>
    %85 = vector.broadcast %83 : vector<1x8x128xf32> to vector<2x8x128xf32>
    %86 = arith.mulf %84, %85 : vector<2x8x128xf32>
    %87 = arith.addf %75, %86 : vector<2x8x128xf32>
    %c7_i32 = arith.constant 7 : i32
    %88 = arith.index_cast %c7_i32 : i32 to index
    %c0_29 = arith.constant 0 : index
    %c0_30 = arith.constant 0 : index
    %89 = vector.load %arg2[%88, %c0_29, %c0_30] : memref<36x2x128xf32, #tpu.memory_space<vmem>>, vector<1x2x128xf32>
    %90 = vector.shape_cast %89 : vector<1x2x128xf32> to vector<2x128xf32>
    %91 = arith.index_cast %c7_i32 : i32 to index
    %c0_31 = arith.constant 0 : index
    %c0_32 = arith.constant 0 : index
    %92 = vector.load %arg3[%91, %c0_31, %c0_32] : memref<36x8x128xf32, #tpu.memory_space<vmem>>, vector<1x8x128xf32>
    %93 = vector.shape_cast %92 : vector<1x8x128xf32> to vector<8x128xf32>
    %94 = vector.shape_cast %90 : vector<2x128xf32> to vector<2x1x128xf32>
    %95 = vector.shape_cast %93 : vector<8x128xf32> to vector<1x8x128xf32>
    %96 = vector.broadcast %94 : vector<2x1x128xf32> to vector<2x8x128xf32>
    %97 = vector.broadcast %95 : vector<1x8x128xf32> to vector<2x8x128xf32>
    %98 = arith.mulf %96, %97 : vector<2x8x128xf32>
    %99 = arith.addf %87, %98 : vector<2x8x128xf32>
    %c8_i32 = arith.constant 8 : i32
    %100 = arith.index_cast %c8_i32 : i32 to index
    %c0_33 = arith.constant 0 : index
    %c0_34 = arith.constant 0 : index
    %101 = vector.load %arg2[%100, %c0_33, %c0_34] : memref<36x2x128xf32, #tpu.memory_space<vmem>>, vector<1x2x128xf32>
    %102 = vector.shape_cast %101 : vector<1x2x128xf32> to vector<2x128xf32>
    %103 = arith.index_cast %c8_i32 : i32 to index
    %c0_35 = arith.constant 0 : index
    %c0_36 = arith.constant 0 : index
    %104 = vector.load %arg3[%103, %c0_35, %c0_36] : memref<36x8x128xf32, #tpu.memory_space<vmem>>, vector<1x8x128xf32>
    %105 = vector.shape_cast %104 : vector<1x8x128xf32> to vector<8x128xf32>
    %106 = vector.shape_cast %102 : vector<2x128xf32> to vector<2x1x128xf32>
    %107 = vector.shape_cast %105 : vector<8x128xf32> to vector<1x8x128xf32>
    %108 = vector.broadcast %106 : vector<2x1x128xf32> to vector<2x8x128xf32>
    %109 = vector.broadcast %107 : vector<1x8x128xf32> to vector<2x8x128xf32>
    %110 = arith.mulf %108, %109 : vector<2x8x128xf32>
    %111 = arith.addf %99, %110 : vector<2x8x128xf32>
    %c9_i32 = arith.constant 9 : i32
    %112 = arith.index_cast %c9_i32 : i32 to index
    %c0_37 = arith.constant 0 : index
    %c0_38 = arith.constant 0 : index
    %113 = vector.load %arg2[%112, %c0_37, %c0_38] : memref<36x2x128xf32, #tpu.memory_space<vmem>>, vector<1x2x128xf32>
    %114 = vector.shape_cast %113 : vector<1x2x128xf32> to vector<2x128xf32>
    %115 = arith.index_cast %c9_i32 : i32 to index
    %c0_39 = arith.constant 0 : index
    %c0_40 = arith.constant 0 : index
    %116 = vector.load %arg3[%115, %c0_39, %c0_40] : memref<36x8x128xf32, #tpu.memory_space<vmem>>, vector<1x8x128xf32>
    %117 = vector.shape_cast %116 : vector<1x8x128xf32> to vector<8x128xf32>
    %118 = vector.shape_cast %114 : vector<2x128xf32> to vector<2x1x128xf32>
    %119 = vector.shape_cast %117 : vector<8x128xf32> to vector<1x8x128xf32>
    %120 = vector.broadcast %118 : vector<2x1x128xf32> to vector<2x8x128xf32>
    %121 = vector.broadcast %119 : vector<1x8x128xf32> to vector<2x8x128xf32>
    %122 = arith.mulf %120, %121 : vector<2x8x128xf32>
    %123 = arith.addf %111, %122 : vector<2x8x128xf32>
    %c10_i32 = arith.constant 10 : i32
    %124 = arith.index_cast %c10_i32 : i32 to index
    %c0_41 = arith.constant 0 : index
    %c0_42 = arith.constant 0 : index
    %125 = vector.load %arg2[%124, %c0_41, %c0_42] : memref<36x2x128xf32, #tpu.memory_space<vmem>>, vector<1x2x128xf32>
    %126 = vector.shape_cast %125 : vector<1x2x128xf32> to vector<2x128xf32>
    %127 = arith.index_cast %c10_i32 : i32 to index
    %c0_43 = arith.constant 0 : index
    %c0_44 = arith.constant 0 : index
    %128 = vector.load %arg3[%127, %c0_43, %c0_44] : memref<36x8x128xf32, #tpu.memory_space<vmem>>, vector<1x8x128xf32>
    %129 = vector.shape_cast %128 : vector<1x8x128xf32> to vector<8x128xf32>
    %130 = vector.shape_cast %126 : vector<2x128xf32> to vector<2x1x128xf32>
    %131 = vector.shape_cast %129 : vector<8x128xf32> to vector<1x8x128xf32>
    %132 = vector.broadcast %130 : vector<2x1x128xf32> to vector<2x8x128xf32>
    %133 = vector.broadcast %131 : vector<1x8x128xf32> to vector<2x8x128xf32>
    %134 = arith.mulf %132, %133 : vector<2x8x128xf32>
    %135 = arith.addf %123, %134 : vector<2x8x128xf32>
    %c11_i32 = arith.constant 11 : i32
    %136 = arith.index_cast %c11_i32 : i32 to index
    %c0_45 = arith.constant 0 : index
    %c0_46 = arith.constant 0 : index
    %137 = vector.load %arg2[%136, %c0_45, %c0_46] : memref<36x2x128xf32, #tpu.memory_space<vmem>>, vector<1x2x128xf32>
    %138 = vector.shape_cast %137 : vector<1x2x128xf32> to vector<2x128xf32>
    %139 = arith.index_cast %c11_i32 : i32 to index
    %c0_47 = arith.constant 0 : index
    %c0_48 = arith.constant 0 : index
    %140 = vector.load %arg3[%139, %c0_47, %c0_48] : memref<36x8x128xf32, #tpu.memory_space<vmem>>, vector<1x8x128xf32>
    %141 = vector.shape_cast %140 : vector<1x8x128xf32> to vector<8x128xf32>
    %142 = vector.shape_cast %138 : vector<2x128xf32> to vector<2x1x128xf32>
    %143 = vector.shape_cast %141 : vector<8x128xf32> to vector<1x8x128xf32>
    %144 = vector.broadcast %142 : vector<2x1x128xf32> to vector<2x8x128xf32>
    %145 = vector.broadcast %143 : vector<1x8x128xf32> to vector<2x8x128xf32>
    %146 = arith.mulf %144, %145 : vector<2x8x128xf32>
    %147 = arith.addf %135, %146 : vector<2x8x128xf32>
    %c12_i32 = arith.constant 12 : i32
    %148 = arith.index_cast %c12_i32 : i32 to index
    %c0_49 = arith.constant 0 : index
    %c0_50 = arith.constant 0 : index
    %149 = vector.load %arg2[%148, %c0_49, %c0_50] : memref<36x2x128xf32, #tpu.memory_space<vmem>>, vector<1x2x128xf32>
    %150 = vector.shape_cast %149 : vector<1x2x128xf32> to vector<2x128xf32>
    %151 = arith.index_cast %c12_i32 : i32 to index
    %c0_51 = arith.constant 0 : index
    %c0_52 = arith.constant 0 : index
    %152 = vector.load %arg3[%151, %c0_51, %c0_52] : memref<36x8x128xf32, #tpu.memory_space<vmem>>, vector<1x8x128xf32>
    %153 = vector.shape_cast %152 : vector<1x8x128xf32> to vector<8x128xf32>
    %154 = vector.shape_cast %150 : vector<2x128xf32> to vector<2x1x128xf32>
    %155 = vector.shape_cast %153 : vector<8x128xf32> to vector<1x8x128xf32>
    %156 = vector.broadcast %154 : vector<2x1x128xf32> to vector<2x8x128xf32>
    %157 = vector.broadcast %155 : vector<1x8x128xf32> to vector<2x8x128xf32>
    %158 = arith.mulf %156, %157 : vector<2x8x128xf32>
    %159 = arith.addf %147, %158 : vector<2x8x128xf32>
    %c13_i32 = arith.constant 13 : i32
    %160 = arith.index_cast %c13_i32 : i32 to index
    %c0_53 = arith.constant 0 : index
    %c0_54 = arith.constant 0 : index
    %161 = vector.load %arg2[%160, %c0_53, %c0_54] : memref<36x2x128xf32, #tpu.memory_space<vmem>>, vector<1x2x128xf32>
    %162 = vector.shape_cast %161 : vector<1x2x128xf32> to vector<2x128xf32>
    %163 = arith.index_cast %c13_i32 : i32 to index
    %c0_55 = arith.constant 0 : index
    %c0_56 = arith.constant 0 : index
    %164 = vector.load %arg3[%163, %c0_55, %c0_56] : memref<36x8x128xf32, #tpu.memory_space<vmem>>, vector<1x8x128xf32>
    %165 = vector.shape_cast %164 : vector<1x8x128xf32> to vector<8x128xf32>
    %166 = vector.shape_cast %162 : vector<2x128xf32> to vector<2x1x128xf32>
    %167 = vector.shape_cast %165 : vector<8x128xf32> to vector<1x8x128xf32>
    %168 = vector.broadcast %166 : vector<2x1x128xf32> to vector<2x8x128xf32>
    %169 = vector.broadcast %167 : vector<1x8x128xf32> to vector<2x8x128xf32>
    %170 = arith.mulf %168, %169 : vector<2x8x128xf32>
    %171 = arith.addf %159, %170 : vector<2x8x128xf32>
    %c14_i32 = arith.constant 14 : i32
    %172 = arith.index_cast %c14_i32 : i32 to index
    %c0_57 = arith.constant 0 : index
    %c0_58 = arith.constant 0 : index
    %173 = vector.load %arg2[%172, %c0_57, %c0_58] : memref<36x2x128xf32, #tpu.memory_space<vmem>>, vector<1x2x128xf32>
    %174 = vector.shape_cast %173 : vector<1x2x128xf32> to vector<2x128xf32>
    %175 = arith.index_cast %c14_i32 : i32 to index
    %c0_59 = arith.constant 0 : index
    %c0_60 = arith.constant 0 : index
    %176 = vector.load %arg3[%175, %c0_59, %c0_60] : memref<36x8x128xf32, #tpu.memory_space<vmem>>, vector<1x8x128xf32>
    %177 = vector.shape_cast %176 : vector<1x8x128xf32> to vector<8x128xf32>
    %178 = vector.shape_cast %174 : vector<2x128xf32> to vector<2x1x128xf32>
    %179 = vector.shape_cast %177 : vector<8x128xf32> to vector<1x8x128xf32>
    %180 = vector.broadcast %178 : vector<2x1x128xf32> to vector<2x8x128xf32>
    %181 = vector.broadcast %179 : vector<1x8x128xf32> to vector<2x8x128xf32>
    %182 = arith.mulf %180, %181 : vector<2x8x128xf32>
    %183 = arith.addf %171, %182 : vector<2x8x128xf32>
    %c15_i32 = arith.constant 15 : i32
    %184 = arith.index_cast %c15_i32 : i32 to index
    %c0_61 = arith.constant 0 : index
    %c0_62 = arith.constant 0 : index
    %185 = vector.load %arg2[%184, %c0_61, %c0_62] : memref<36x2x128xf32, #tpu.memory_space<vmem>>, vector<1x2x128xf32>
    %186 = vector.shape_cast %185 : vector<1x2x128xf32> to vector<2x128xf32>
    %187 = arith.index_cast %c15_i32 : i32 to index
    %c0_63 = arith.constant 0 : index
    %c0_64 = arith.constant 0 : index
    %188 = vector.load %arg3[%187, %c0_63, %c0_64] : memref<36x8x128xf32, #tpu.memory_space<vmem>>, vector<1x8x128xf32>
    %189 = vector.shape_cast %188 : vector<1x8x128xf32> to vector<8x128xf32>
    %190 = vector.shape_cast %186 : vector<2x128xf32> to vector<2x1x128xf32>
    %191 = vector.shape_cast %189 : vector<8x128xf32> to vector<1x8x128xf32>
    %192 = vector.broadcast %190 : vector<2x1x128xf32> to vector<2x8x128xf32>
    %193 = vector.broadcast %191 : vector<1x8x128xf32> to vector<2x8x128xf32>
    %194 = arith.mulf %192, %193 : vector<2x8x128xf32>
    %195 = arith.addf %183, %194 : vector<2x8x128xf32>
    %c16_i32 = arith.constant 16 : i32
    %196 = arith.index_cast %c16_i32 : i32 to index
    %c0_65 = arith.constant 0 : index
    %c0_66 = arith.constant 0 : index
    %197 = vector.load %arg2[%196, %c0_65, %c0_66] : memref<36x2x128xf32, #tpu.memory_space<vmem>>, vector<1x2x128xf32>
    %198 = vector.shape_cast %197 : vector<1x2x128xf32> to vector<2x128xf32>
    %199 = arith.index_cast %c16_i32 : i32 to index
    %c0_67 = arith.constant 0 : index
    %c0_68 = arith.constant 0 : index
    %200 = vector.load %arg3[%199, %c0_67, %c0_68] : memref<36x8x128xf32, #tpu.memory_space<vmem>>, vector<1x8x128xf32>
    %201 = vector.shape_cast %200 : vector<1x8x128xf32> to vector<8x128xf32>
    %202 = vector.shape_cast %198 : vector<2x128xf32> to vector<2x1x128xf32>
    %203 = vector.shape_cast %201 : vector<8x128xf32> to vector<1x8x128xf32>
    %204 = vector.broadcast %202 : vector<2x1x128xf32> to vector<2x8x128xf32>
    %205 = vector.broadcast %203 : vector<1x8x128xf32> to vector<2x8x128xf32>
    %206 = arith.mulf %204, %205 : vector<2x8x128xf32>
    %207 = arith.addf %195, %206 : vector<2x8x128xf32>
    %c17_i32 = arith.constant 17 : i32
    %208 = arith.index_cast %c17_i32 : i32 to index
    %c0_69 = arith.constant 0 : index
    %c0_70 = arith.constant 0 : index
    %209 = vector.load %arg2[%208, %c0_69, %c0_70] : memref<36x2x128xf32, #tpu.memory_space<vmem>>, vector<1x2x128xf32>
    %210 = vector.shape_cast %209 : vector<1x2x128xf32> to vector<2x128xf32>
    %211 = arith.index_cast %c17_i32 : i32 to index
    %c0_71 = arith.constant 0 : index
    %c0_72 = arith.constant 0 : index
    %212 = vector.load %arg3[%211, %c0_71, %c0_72] : memref<36x8x128xf32, #tpu.memory_space<vmem>>, vector<1x8x128xf32>
    %213 = vector.shape_cast %212 : vector<1x8x128xf32> to vector<8x128xf32>
    %214 = vector.shape_cast %210 : vector<2x128xf32> to vector<2x1x128xf32>
    %215 = vector.shape_cast %213 : vector<8x128xf32> to vector<1x8x128xf32>
    %216 = vector.broadcast %214 : vector<2x1x128xf32> to vector<2x8x128xf32>
    %217 = vector.broadcast %215 : vector<1x8x128xf32> to vector<2x8x128xf32>
    %218 = arith.mulf %216, %217 : vector<2x8x128xf32>
    %219 = arith.addf %207, %218 : vector<2x8x128xf32>
    %c18_i32 = arith.constant 18 : i32
    %220 = arith.index_cast %c18_i32 : i32 to index
    %c0_73 = arith.constant 0 : index
    %c0_74 = arith.constant 0 : index
    %221 = vector.load %arg2[%220, %c0_73, %c0_74] : memref<36x2x128xf32, #tpu.memory_space<vmem>>, vector<1x2x128xf32>
    %222 = vector.shape_cast %221 : vector<1x2x128xf32> to vector<2x128xf32>
    %223 = arith.index_cast %c18_i32 : i32 to index
    %c0_75 = arith.constant 0 : index
    %c0_76 = arith.constant 0 : index
    %224 = vector.load %arg3[%223, %c0_75, %c0_76] : memref<36x8x128xf32, #tpu.memory_space<vmem>>, vector<1x8x128xf32>
    %225 = vector.shape_cast %224 : vector<1x8x128xf32> to vector<8x128xf32>
    %226 = vector.shape_cast %222 : vector<2x128xf32> to vector<2x1x128xf32>
    %227 = vector.shape_cast %225 : vector<8x128xf32> to vector<1x8x128xf32>
    %228 = vector.broadcast %226 : vector<2x1x128xf32> to vector<2x8x128xf32>
    %229 = vector.broadcast %227 : vector<1x8x128xf32> to vector<2x8x128xf32>
    %230 = arith.mulf %228, %229 : vector<2x8x128xf32>
    %231 = arith.addf %219, %230 : vector<2x8x128xf32>
    %c19_i32 = arith.constant 19 : i32
    %232 = arith.index_cast %c19_i32 : i32 to index
    %c0_77 = arith.constant 0 : index
    %c0_78 = arith.constant 0 : index
    %233 = vector.load %arg2[%232, %c0_77, %c0_78] : memref<36x2x128xf32, #tpu.memory_space<vmem>>, vector<1x2x128xf32>
    %234 = vector.shape_cast %233 : vector<1x2x128xf32> to vector<2x128xf32>
    %235 = arith.index_cast %c19_i32 : i32 to index
    %c0_79 = arith.constant 0 : index
    %c0_80 = arith.constant 0 : index
    %236 = vector.load %arg3[%235, %c0_79, %c0_80] : memref<36x8x128xf32, #tpu.memory_space<vmem>>, vector<1x8x128xf32>
    %237 = vector.shape_cast %236 : vector<1x8x128xf32> to vector<8x128xf32>
    %238 = vector.shape_cast %234 : vector<2x128xf32> to vector<2x1x128xf32>
    %239 = vector.shape_cast %237 : vector<8x128xf32> to vector<1x8x128xf32>
    %240 = vector.broadcast %238 : vector<2x1x128xf32> to vector<2x8x128xf32>
    %241 = vector.broadcast %239 : vector<1x8x128xf32> to vector<2x8x128xf32>
    %242 = arith.mulf %240, %241 : vector<2x8x128xf32>
    %243 = arith.addf %231, %242 : vector<2x8x128xf32>
    %c20_i32 = arith.constant 20 : i32
    %244 = arith.index_cast %c20_i32 : i32 to index
    %c0_81 = arith.constant 0 : index
    %c0_82 = arith.constant 0 : index
    %245 = vector.load %arg2[%244, %c0_81, %c0_82] : memref<36x2x128xf32, #tpu.memory_space<vmem>>, vector<1x2x128xf32>
    %246 = vector.shape_cast %245 : vector<1x2x128xf32> to vector<2x128xf32>
    %247 = arith.index_cast %c20_i32 : i32 to index
    %c0_83 = arith.constant 0 : index
    %c0_84 = arith.constant 0 : index
    %248 = vector.load %arg3[%247, %c0_83, %c0_84] : memref<36x8x128xf32, #tpu.memory_space<vmem>>, vector<1x8x128xf32>
    %249 = vector.shape_cast %248 : vector<1x8x128xf32> to vector<8x128xf32>
    %250 = vector.shape_cast %246 : vector<2x128xf32> to vector<2x1x128xf32>
    %251 = vector.shape_cast %249 : vector<8x128xf32> to vector<1x8x128xf32>
    %252 = vector.broadcast %250 : vector<2x1x128xf32> to vector<2x8x128xf32>
    %253 = vector.broadcast %251 : vector<1x8x128xf32> to vector<2x8x128xf32>
    %254 = arith.mulf %252, %253 : vector<2x8x128xf32>
    %255 = arith.addf %243, %254 : vector<2x8x128xf32>
    %c21_i32 = arith.constant 21 : i32
    %256 = arith.index_cast %c21_i32 : i32 to index
    %c0_85 = arith.constant 0 : index
    %c0_86 = arith.constant 0 : index
    %257 = vector.load %arg2[%256, %c0_85, %c0_86] : memref<36x2x128xf32, #tpu.memory_space<vmem>>, vector<1x2x128xf32>
    %258 = vector.shape_cast %257 : vector<1x2x128xf32> to vector<2x128xf32>
    %259 = arith.index_cast %c21_i32 : i32 to index
    %c0_87 = arith.constant 0 : index
    %c0_88 = arith.constant 0 : index
    %260 = vector.load %arg3[%259, %c0_87, %c0_88] : memref<36x8x128xf32, #tpu.memory_space<vmem>>, vector<1x8x128xf32>
    %261 = vector.shape_cast %260 : vector<1x8x128xf32> to vector<8x128xf32>
    %262 = vector.shape_cast %258 : vector<2x128xf32> to vector<2x1x128xf32>
    %263 = vector.shape_cast %261 : vector<8x128xf32> to vector<1x8x128xf32>
    %264 = vector.broadcast %262 : vector<2x1x128xf32> to vector<2x8x128xf32>
    %265 = vector.broadcast %263 : vector<1x8x128xf32> to vector<2x8x128xf32>
    %266 = arith.mulf %264, %265 : vector<2x8x128xf32>
    %267 = arith.addf %255, %266 : vector<2x8x128xf32>
    %c22_i32 = arith.constant 22 : i32
    %268 = arith.index_cast %c22_i32 : i32 to index
    %c0_89 = arith.constant 0 : index
    %c0_90 = arith.constant 0 : index
    %269 = vector.load %arg2[%268, %c0_89, %c0_90] : memref<36x2x128xf32, #tpu.memory_space<vmem>>, vector<1x2x128xf32>
    %270 = vector.shape_cast %269 : vector<1x2x128xf32> to vector<2x128xf32>
    %271 = arith.index_cast %c22_i32 : i32 to index
    %c0_91 = arith.constant 0 : index
    %c0_92 = arith.constant 0 : index
    %272 = vector.load %arg3[%271, %c0_91, %c0_92] : memref<36x8x128xf32, #tpu.memory_space<vmem>>, vector<1x8x128xf32>
    %273 = vector.shape_cast %272 : vector<1x8x128xf32> to vector<8x128xf32>
    %274 = vector.shape_cast %270 : vector<2x128xf32> to vector<2x1x128xf32>
    %275 = vector.shape_cast %273 : vector<8x128xf32> to vector<1x8x128xf32>
    %276 = vector.broadcast %274 : vector<2x1x128xf32> to vector<2x8x128xf32>
    %277 = vector.broadcast %275 : vector<1x8x128xf32> to vector<2x8x128xf32>
    %278 = arith.mulf %276, %277 : vector<2x8x128xf32>
    %279 = arith.addf %267, %278 : vector<2x8x128xf32>
    %c23_i32 = arith.constant 23 : i32
    %280 = arith.index_cast %c23_i32 : i32 to index
    %c0_93 = arith.constant 0 : index
    %c0_94 = arith.constant 0 : index
    %281 = vector.load %arg2[%280, %c0_93, %c0_94] : memref<36x2x128xf32, #tpu.memory_space<vmem>>, vector<1x2x128xf32>
    %282 = vector.shape_cast %281 : vector<1x2x128xf32> to vector<2x128xf32>
    %283 = arith.index_cast %c23_i32 : i32 to index
    %c0_95 = arith.constant 0 : index
    %c0_96 = arith.constant 0 : index
    %284 = vector.load %arg3[%283, %c0_95, %c0_96] : memref<36x8x128xf32, #tpu.memory_space<vmem>>, vector<1x8x128xf32>
    %285 = vector.shape_cast %284 : vector<1x8x128xf32> to vector<8x128xf32>
    %286 = vector.shape_cast %282 : vector<2x128xf32> to vector<2x1x128xf32>
    %287 = vector.shape_cast %285 : vector<8x128xf32> to vector<1x8x128xf32>
    %288 = vector.broadcast %286 : vector<2x1x128xf32> to vector<2x8x128xf32>
    %289 = vector.broadcast %287 : vector<1x8x128xf32> to vector<2x8x128xf32>
    %290 = arith.mulf %288, %289 : vector<2x8x128xf32>
    %291 = arith.addf %279, %290 : vector<2x8x128xf32>
    %c24_i32 = arith.constant 24 : i32
    %292 = arith.index_cast %c24_i32 : i32 to index
    %c0_97 = arith.constant 0 : index
    %c0_98 = arith.constant 0 : index
    %293 = vector.load %arg2[%292, %c0_97, %c0_98] : memref<36x2x128xf32, #tpu.memory_space<vmem>>, vector<1x2x128xf32>
    %294 = vector.shape_cast %293 : vector<1x2x128xf32> to vector<2x128xf32>
    %295 = arith.index_cast %c24_i32 : i32 to index
    %c0_99 = arith.constant 0 : index
    %c0_100 = arith.constant 0 : index
    %296 = vector.load %arg3[%295, %c0_99, %c0_100] : memref<36x8x128xf32, #tpu.memory_space<vmem>>, vector<1x8x128xf32>
    %297 = vector.shape_cast %296 : vector<1x8x128xf32> to vector<8x128xf32>
    %298 = vector.shape_cast %294 : vector<2x128xf32> to vector<2x1x128xf32>
    %299 = vector.shape_cast %297 : vector<8x128xf32> to vector<1x8x128xf32>
    %300 = vector.broadcast %298 : vector<2x1x128xf32> to vector<2x8x128xf32>
    %301 = vector.broadcast %299 : vector<1x8x128xf32> to vector<2x8x128xf32>
    %302 = arith.mulf %300, %301 : vector<2x8x128xf32>
    %303 = arith.addf %291, %302 : vector<2x8x128xf32>
    %c25_i32 = arith.constant 25 : i32
    %304 = arith.index_cast %c25_i32 : i32 to index
    %c0_101 = arith.constant 0 : index
    %c0_102 = arith.constant 0 : index
    %305 = vector.load %arg2[%304, %c0_101, %c0_102] : memref<36x2x128xf32, #tpu.memory_space<vmem>>, vector<1x2x128xf32>
    %306 = vector.shape_cast %305 : vector<1x2x128xf32> to vector<2x128xf32>
    %307 = arith.index_cast %c25_i32 : i32 to index
    %c0_103 = arith.constant 0 : index
    %c0_104 = arith.constant 0 : index
    %308 = vector.load %arg3[%307, %c0_103, %c0_104] : memref<36x8x128xf32, #tpu.memory_space<vmem>>, vector<1x8x128xf32>
    %309 = vector.shape_cast %308 : vector<1x8x128xf32> to vector<8x128xf32>
    %310 = vector.shape_cast %306 : vector<2x128xf32> to vector<2x1x128xf32>
    %311 = vector.shape_cast %309 : vector<8x128xf32> to vector<1x8x128xf32>
    %312 = vector.broadcast %310 : vector<2x1x128xf32> to vector<2x8x128xf32>
    %313 = vector.broadcast %311 : vector<1x8x128xf32> to vector<2x8x128xf32>
    %314 = arith.mulf %312, %313 : vector<2x8x128xf32>
    %315 = arith.addf %303, %314 : vector<2x8x128xf32>
    %c26_i32 = arith.constant 26 : i32
    %316 = arith.index_cast %c26_i32 : i32 to index
    %c0_105 = arith.constant 0 : index
    %c0_106 = arith.constant 0 : index
    %317 = vector.load %arg2[%316, %c0_105, %c0_106] : memref<36x2x128xf32, #tpu.memory_space<vmem>>, vector<1x2x128xf32>
    %318 = vector.shape_cast %317 : vector<1x2x128xf32> to vector<2x128xf32>
    %319 = arith.index_cast %c26_i32 : i32 to index
    %c0_107 = arith.constant 0 : index
    %c0_108 = arith.constant 0 : index
    %320 = vector.load %arg3[%319, %c0_107, %c0_108] : memref<36x8x128xf32, #tpu.memory_space<vmem>>, vector<1x8x128xf32>
    %321 = vector.shape_cast %320 : vector<1x8x128xf32> to vector<8x128xf32>
    %322 = vector.shape_cast %318 : vector<2x128xf32> to vector<2x1x128xf32>
    %323 = vector.shape_cast %321 : vector<8x128xf32> to vector<1x8x128xf32>
    %324 = vector.broadcast %322 : vector<2x1x128xf32> to vector<2x8x128xf32>
    %325 = vector.broadcast %323 : vector<1x8x128xf32> to vector<2x8x128xf32>
    %326 = arith.mulf %324, %325 : vector<2x8x128xf32>
    %327 = arith.addf %315, %326 : vector<2x8x128xf32>
    %c27_i32 = arith.constant 27 : i32
    %328 = arith.index_cast %c27_i32 : i32 to index
    %c0_109 = arith.constant 0 : index
    %c0_110 = arith.constant 0 : index
    %329 = vector.load %arg2[%328, %c0_109, %c0_110] : memref<36x2x128xf32, #tpu.memory_space<vmem>>, vector<1x2x128xf32>
    %330 = vector.shape_cast %329 : vector<1x2x128xf32> to vector<2x128xf32>
    %331 = arith.index_cast %c27_i32 : i32 to index
    %c0_111 = arith.constant 0 : index
    %c0_112 = arith.constant 0 : index
    %332 = vector.load %arg3[%331, %c0_111, %c0_112] : memref<36x8x128xf32, #tpu.memory_space<vmem>>, vector<1x8x128xf32>
    %333 = vector.shape_cast %332 : vector<1x8x128xf32> to vector<8x128xf32>
    %334 = vector.shape_cast %330 : vector<2x128xf32> to vector<2x1x128xf32>
    %335 = vector.shape_cast %333 : vector<8x128xf32> to vector<1x8x128xf32>
    %336 = vector.broadcast %334 : vector<2x1x128xf32> to vector<2x8x128xf32>
    %337 = vector.broadcast %335 : vector<1x8x128xf32> to vector<2x8x128xf32>
    %338 = arith.mulf %336, %337 : vector<2x8x128xf32>
    %339 = arith.addf %327, %338 : vector<2x8x128xf32>
    %c28_i32 = arith.constant 28 : i32
    %340 = arith.index_cast %c28_i32 : i32 to index
    %c0_113 = arith.constant 0 : index
    %c0_114 = arith.constant 0 : index
    %341 = vector.load %arg2[%340, %c0_113, %c0_114] : memref<36x2x128xf32, #tpu.memory_space<vmem>>, vector<1x2x128xf32>
    %342 = vector.shape_cast %341 : vector<1x2x128xf32> to vector<2x128xf32>
    %343 = arith.index_cast %c28_i32 : i32 to index
    %c0_115 = arith.constant 0 : index
    %c0_116 = arith.constant 0 : index
    %344 = vector.load %arg3[%343, %c0_115, %c0_116] : memref<36x8x128xf32, #tpu.memory_space<vmem>>, vector<1x8x128xf32>
    %345 = vector.shape_cast %344 : vector<1x8x128xf32> to vector<8x128xf32>
    %346 = vector.shape_cast %342 : vector<2x128xf32> to vector<2x1x128xf32>
    %347 = vector.shape_cast %345 : vector<8x128xf32> to vector<1x8x128xf32>
    %348 = vector.broadcast %346 : vector<2x1x128xf32> to vector<2x8x128xf32>
    %349 = vector.broadcast %347 : vector<1x8x128xf32> to vector<2x8x128xf32>
    %350 = arith.mulf %348, %349 : vector<2x8x128xf32>
    %351 = arith.addf %339, %350 : vector<2x8x128xf32>
    %c29_i32 = arith.constant 29 : i32
    %352 = arith.index_cast %c29_i32 : i32 to index
    %c0_117 = arith.constant 0 : index
    %c0_118 = arith.constant 0 : index
    %353 = vector.load %arg2[%352, %c0_117, %c0_118] : memref<36x2x128xf32, #tpu.memory_space<vmem>>, vector<1x2x128xf32>
    %354 = vector.shape_cast %353 : vector<1x2x128xf32> to vector<2x128xf32>
    %355 = arith.index_cast %c29_i32 : i32 to index
    %c0_119 = arith.constant 0 : index
    %c0_120 = arith.constant 0 : index
    %356 = vector.load %arg3[%355, %c0_119, %c0_120] : memref<36x8x128xf32, #tpu.memory_space<vmem>>, vector<1x8x128xf32>
    %357 = vector.shape_cast %356 : vector<1x8x128xf32> to vector<8x128xf32>
    %358 = vector.shape_cast %354 : vector<2x128xf32> to vector<2x1x128xf32>
    %359 = vector.shape_cast %357 : vector<8x128xf32> to vector<1x8x128xf32>
    %360 = vector.broadcast %358 : vector<2x1x128xf32> to vector<2x8x128xf32>
    %361 = vector.broadcast %359 : vector<1x8x128xf32> to vector<2x8x128xf32>
    %362 = arith.mulf %360, %361 : vector<2x8x128xf32>
    %363 = arith.addf %351, %362 : vector<2x8x128xf32>
    %c30_i32 = arith.constant 30 : i32
    %364 = arith.index_cast %c30_i32 : i32 to index
    %c0_121 = arith.constant 0 : index
    %c0_122 = arith.constant 0 : index
    %365 = vector.load %arg2[%364, %c0_121, %c0_122] : memref<36x2x128xf32, #tpu.memory_space<vmem>>, vector<1x2x128xf32>
    %366 = vector.shape_cast %365 : vector<1x2x128xf32> to vector<2x128xf32>
    %367 = arith.index_cast %c30_i32 : i32 to index
    %c0_123 = arith.constant 0 : index
    %c0_124 = arith.constant 0 : index
    %368 = vector.load %arg3[%367, %c0_123, %c0_124] : memref<36x8x128xf32, #tpu.memory_space<vmem>>, vector<1x8x128xf32>
    %369 = vector.shape_cast %368 : vector<1x8x128xf32> to vector<8x128xf32>
    %370 = vector.shape_cast %366 : vector<2x128xf32> to vector<2x1x128xf32>
    %371 = vector.shape_cast %369 : vector<8x128xf32> to vector<1x8x128xf32>
    %372 = vector.broadcast %370 : vector<2x1x128xf32> to vector<2x8x128xf32>
    %373 = vector.broadcast %371 : vector<1x8x128xf32> to vector<2x8x128xf32>
    %374 = arith.mulf %372, %373 : vector<2x8x128xf32>
    %375 = arith.addf %363, %374 : vector<2x8x128xf32>
    %c31_i32 = arith.constant 31 : i32
    %376 = arith.index_cast %c31_i32 : i32 to index
    %c0_125 = arith.constant 0 : index
    %c0_126 = arith.constant 0 : index
    %377 = vector.load %arg2[%376, %c0_125, %c0_126] : memref<36x2x128xf32, #tpu.memory_space<vmem>>, vector<1x2x128xf32>
    %378 = vector.shape_cast %377 : vector<1x2x128xf32> to vector<2x128xf32>
    %379 = arith.index_cast %c31_i32 : i32 to index
    %c0_127 = arith.constant 0 : index
    %c0_128 = arith.constant 0 : index
    %380 = vector.load %arg3[%379, %c0_127, %c0_128] : memref<36x8x128xf32, #tpu.memory_space<vmem>>, vector<1x8x128xf32>
    %381 = vector.shape_cast %380 : vector<1x8x128xf32> to vector<8x128xf32>
    %382 = vector.shape_cast %378 : vector<2x128xf32> to vector<2x1x128xf32>
    %383 = vector.shape_cast %381 : vector<8x128xf32> to vector<1x8x128xf32>
    %384 = vector.broadcast %382 : vector<2x1x128xf32> to vector<2x8x128xf32>
    %385 = vector.broadcast %383 : vector<1x8x128xf32> to vector<2x8x128xf32>
    %386 = arith.mulf %384, %385 : vector<2x8x128xf32>
    %387 = arith.addf %375, %386 : vector<2x8x128xf32>
    %c32_i32 = arith.constant 32 : i32
    %388 = arith.index_cast %c32_i32 : i32 to index
    %c0_129 = arith.constant 0 : index
    %c0_130 = arith.constant 0 : index
    %389 = vector.load %arg2[%388, %c0_129, %c0_130] : memref<36x2x128xf32, #tpu.memory_space<vmem>>, vector<1x2x128xf32>
    %390 = vector.shape_cast %389 : vector<1x2x128xf32> to vector<2x128xf32>
    %391 = arith.index_cast %c32_i32 : i32 to index
    %c0_131 = arith.constant 0 : index
    %c0_132 = arith.constant 0 : index
    %392 = vector.load %arg3[%391, %c0_131, %c0_132] : memref<36x8x128xf32, #tpu.memory_space<vmem>>, vector<1x8x128xf32>
    %393 = vector.shape_cast %392 : vector<1x8x128xf32> to vector<8x128xf32>
    %394 = vector.shape_cast %390 : vector<2x128xf32> to vector<2x1x128xf32>
    %395 = vector.shape_cast %393 : vector<8x128xf32> to vector<1x8x128xf32>
    %396 = vector.broadcast %394 : vector<2x1x128xf32> to vector<2x8x128xf32>
    %397 = vector.broadcast %395 : vector<1x8x128xf32> to vector<2x8x128xf32>
    %398 = arith.mulf %396, %397 : vector<2x8x128xf32>
    %399 = arith.addf %387, %398 : vector<2x8x128xf32>
    %c33_i32 = arith.constant 33 : i32
    %400 = arith.index_cast %c33_i32 : i32 to index
    %c0_133 = arith.constant 0 : index
    %c0_134 = arith.constant 0 : index
    %401 = vector.load %arg2[%400, %c0_133, %c0_134] : memref<36x2x128xf32, #tpu.memory_space<vmem>>, vector<1x2x128xf32>
    %402 = vector.shape_cast %401 : vector<1x2x128xf32> to vector<2x128xf32>
    %403 = arith.index_cast %c33_i32 : i32 to index
    %c0_135 = arith.constant 0 : index
    %c0_136 = arith.constant 0 : index
    %404 = vector.load %arg3[%403, %c0_135, %c0_136] : memref<36x8x128xf32, #tpu.memory_space<vmem>>, vector<1x8x128xf32>
    %405 = vector.shape_cast %404 : vector<1x8x128xf32> to vector<8x128xf32>
    %406 = vector.shape_cast %402 : vector<2x128xf32> to vector<2x1x128xf32>
    %407 = vector.shape_cast %405 : vector<8x128xf32> to vector<1x8x128xf32>
    %408 = vector.broadcast %406 : vector<2x1x128xf32> to vector<2x8x128xf32>
    %409 = vector.broadcast %407 : vector<1x8x128xf32> to vector<2x8x128xf32>
    %410 = arith.mulf %408, %409 : vector<2x8x128xf32>
    %411 = arith.addf %399, %410 : vector<2x8x128xf32>
    %c34_i32 = arith.constant 34 : i32
    %412 = arith.index_cast %c34_i32 : i32 to index
    %c0_137 = arith.constant 0 : index
    %c0_138 = arith.constant 0 : index
    %413 = vector.load %arg2[%412, %c0_137, %c0_138] : memref<36x2x128xf32, #tpu.memory_space<vmem>>, vector<1x2x128xf32>
    %414 = vector.shape_cast %413 : vector<1x2x128xf32> to vector<2x128xf32>
    %415 = arith.index_cast %c34_i32 : i32 to index
    %c0_139 = arith.constant 0 : index
    %c0_140 = arith.constant 0 : index
    %416 = vector.load %arg3[%415, %c0_139, %c0_140] : memref<36x8x128xf32, #tpu.memory_space<vmem>>, vector<1x8x128xf32>
    %417 = vector.shape_cast %416 : vector<1x8x128xf32> to vector<8x128xf32>
    %418 = vector.shape_cast %414 : vector<2x128xf32> to vector<2x1x128xf32>
    %419 = vector.shape_cast %417 : vector<8x128xf32> to vector<1x8x128xf32>
    %420 = vector.broadcast %418 : vector<2x1x128xf32> to vector<2x8x128xf32>
    %421 = vector.broadcast %419 : vector<1x8x128xf32> to vector<2x8x128xf32>
    %422 = arith.mulf %420, %421 : vector<2x8x128xf32>
    %423 = arith.addf %411, %422 : vector<2x8x128xf32>
    %c35_i32 = arith.constant 35 : i32
    %424 = arith.index_cast %c35_i32 : i32 to index
    %c0_141 = arith.constant 0 : index
    %c0_142 = arith.constant 0 : index
    %425 = vector.load %arg2[%424, %c0_141, %c0_142] : memref<36x2x128xf32, #tpu.memory_space<vmem>>, vector<1x2x128xf32>
    %426 = vector.shape_cast %425 : vector<1x2x128xf32> to vector<2x128xf32>
    %427 = arith.index_cast %c35_i32 : i32 to index
    %c0_143 = arith.constant 0 : index
    %c0_144 = arith.constant 0 : index
    %428 = vector.load %arg3[%427, %c0_143, %c0_144] : memref<36x8x128xf32, #tpu.memory_space<vmem>>, vector<1x8x128xf32>
    %429 = vector.shape_cast %428 : vector<1x8x128xf32> to vector<8x128xf32>
    %430 = vector.shape_cast %426 : vector<2x128xf32> to vector<2x1x128xf32>
    %431 = vector.shape_cast %429 : vector<8x128xf32> to vector<1x8x128xf32>
    %432 = vector.broadcast %430 : vector<2x1x128xf32> to vector<2x8x128xf32>
    %433 = vector.broadcast %431 : vector<1x8x128xf32> to vector<2x8x128xf32>
    %434 = arith.mulf %432, %433 : vector<2x8x128xf32>
    %435 = arith.addf %423, %434 : vector<2x8x128xf32>
    %c36_i32 = arith.constant 36 : i32
    %c0_145 = arith.constant 0 : index
    %c0_146 = arith.constant 0 : index
    %c0_147 = arith.constant 0 : index
    %436 = vector.load %arg5[%c0_145, %c0_146, %c0_147] : memref<2x8x128xf32, #tpu.memory_space<vmem>>, vector<2x8x128xf32>
    tpu.vector_store %arg5[%c0_145, %c0_146, %c0_147], %435 {strides = array<i32>} : memref<2x8x128xf32, #tpu.memory_space<vmem>>, vector<2x8x128xf32>,
    return
  }
  func.func @transform_0(%arg0: i32, %arg1: i32) -> (i32, i32, i32) {
    %c0_i32 = arith.constant 0 : i32
    %c0_i32_0 = arith.constant 0 : i32
    %c0_i32_1 = arith.constant 0 : i32
    return %c0_i32, %c0_i32_0, %arg0 : i32, i32, i32
  }
  func.func @transform_1(%arg0: i32, %arg1: i32) -> (i32, i32, i32) {
    %c0_i32 = arith.constant 0 : i32
    %c0_i32_0 = arith.constant 0 : i32
    return %c0_i32, %arg1, %arg0 : i32, i32, i32
  }
  func.func @transform_2(%arg0: i32, %arg1: i32) -> (i32, i32) {
    %c0_i32 = arith.constant 0 : i32
    return %arg1, %arg0 : i32, i32
  }
  func.func @transform_3(%arg0: i32, %arg1: i32) -> (i32, i32, i32) {
    %c0_i32 = arith.constant 0 : i32
    %c0_i32_0 = arith.constant 0 : i32
    return %c0_i32, %arg1, %arg0 : i32, i32, i32
  }
}

</mosaic_0001>

<llo_original>
// kernel: tpu_custom_call.1
$region0: #{tpu_custom_call.1}
  #allocation0 [shape = 'u32[]', space=smem, size = 0x4, offset = 0x4, fixed_abs, tag = 'smem constant byte address 0x4 - core index']
  #allocation1 [shape = 'u32[144,128]{1,0:T(1,128)}', space=vmem, size = 0x12000, scoped, tag = 'internal scratch']
  %s0 = inlined_call_operand.hbm [shape: f32[36,2,256], index: 0, kind: input, shape index: {}]
  %s1 = inlined_call_operand.hbm [shape: f32[36,8,256], index: 1, kind: input, shape index: {}]
  %s2 = inlined_call_operand.hbm [shape: f32[8,256], index: 2, kind: input, shape index: {}]
  %s3 = inlined_call_operand.hbm [shape: f32[2,8,256], index: 3, kind: output, shape index: {}]
  %s4 = sld [smem:[#allocation0]]
  $region57: #{tpu_custom_call.1} parent=0
    _
  %s6 = ssub.s32 1, %s4
  %s7 = scalar_select 0, %s6, %s4
  $region1: #{tpu_custom_call.1} parent=0
    #allocation2 [shape = 'u8[73728]{0}', space=vmem, size = 0x12000, scoped, tag = 'input window, operand 0']
    #allocation3 [shape = 's32[2]{0}', space=sflag, size = 0x8, scoped, tag = 'scoped memory for tpu_custom_call.1']
    #allocation4 [shape = 's32[2]{0}', space=sflag, size = 0x8, scoped, tag = 'scoped memory for tpu_custom_call.1']
    #allocation5 [shape = 'u8[294912]{0}', space=vmem, size = 0x48000, scoped, tag = 'input window, operand 1']
    #allocation6 [shape = 's32[2]{0}', space=sflag, size = 0x8, scoped, tag = 'scoped memory for tpu_custom_call.1']
    #allocation7 [shape = 'u8[8192]{0}', space=vmem, size = 0x2000, scoped, tag = 'input window, operand 2']
    #allocation8 [shape = 'u8[16384]{0}', space=vmem, size = 0x4000, scoped, tag = 'output window, operand 0']
    %8 = vsyncpa [#allocation3], 0
    %s9 = scalar_lea.sflag [#allocation3], 1
    %10 = vsyncpa %s9, 0
    %11 = vsyncpa [#allocation6], 0
    %s12 = scalar_lea.sflag [#allocation6], 1
    %13 = vsyncpa %s12, 0
    %14 = vsyncpa [#allocation4], 0
    %s15 = scalar_lea.sflag [#allocation4], 1
    %16 = vsyncpa %s15, 0
    loop: start=0, step=1, limit=4
    $region2: #{tpu_custom_call.1} parent=1 // loop_pre_header
      _
    $region3: #{tpu_custom_call.1} parent=1 // loop_header
      %s18 = sphi 0, %s22
      %p19 = scmp.ge.s32.totalorder %s18, 4
      %s25 = sphi 0, %s37
      %s26 = sphi 0, %s33
      %s27 = sphi 0, %s25
      %s28 = sphi 0, %s26
      %s29 = sphi 0, %s27
      %s30 = sphi 0, %s28
      %s40 = sphi 0, %s42
      %s43 = sphi 0, %s40
      %s44 = sphi 0, %s43
      %s60 = sphi 0, %s44
      %s68 = sphi 0, %s70
      %s71 = sphi 0, %s68
      %s72 = sphi 0, %s71
      %s88 = sphi 0, %s72
      %s96 = sphi 0, %s98
      %s99 = sphi 0, %s96
      %s100 = sphi 0, %s99
      %s116 = sphi 0, %s100
      %s124 = sphi 0, %s126
      %s127 = sphi 0, %s124
      %s128 = sphi 0, %s127
      %s144 = sphi 0, %s128
    $region4: #{tpu_custom_call.1} parent=1 // loop_header_branch
      %21 = sbr.rel (%p19) target = $region8
    $region5: #{tpu_custom_call.1} parent=1 // loop_body
      %s23 = ssub.s32 %s18, 1
      %s24 = ssub.s32 %s18, 2
      %s31 = sadd.s32 1, %s26
      %p32 = scmp.ge.s32.totalorder %s31, 1
      %s33 = scalar_select %p32, 0, %s31
      %s34 = sadd.s32 1, %s25
      %s35 = scalar_select %p32, %s34, %s25
      %p36 = scmp.ge.s32.totalorder %s35, 2
      %s37 = scalar_select %p36, 0, %s35
      %s38 = ssub.s32 %s25, %s37
      %p39 = scmp.eq.s32.totalorder %s38, 0
      %s41 = sadd.s32 %s40, 1
      %s42 = scalar_select %p39, %s40, %s41
      %p45 = pneg %p39
      %p46 = scmp.eq.s32.totalorder %s18, 1
      %p47 = por %p45, %p46
      %p48 = scmp.ne.s32.totalorder %s40, %s43
      %p49 = scmp.eq.s32.totalorder %s18, 0
      %p50 = por %p48, %p49
      %p51 = scmp.ne.s32.totalorder %s40, %s43
      %p52 = scmp.eq.s32.totalorder %s23, 1
      %p53 = por %p51, %p52
      %p54 = scmp.ne.s32.totalorder %s43, %s44
      %p55 = scmp.eq.s32.totalorder %s23, 0
      %p56 = por %p54, %p55
      %p57 = scmp.ne.s32.totalorder %s43, %s44
      %p58 = scmp.eq.s32.totalorder %s24, 1
      %p59 = por %p57, %p58
      %p61 = scmp.ne.s32.totalorder %s44, %s60
      %p62 = scmp.eq.s32.totalorder %s24, 0
      %p63 = por %p61, %p62
      %s64 = ssub.s32 %s26, %s33
      %s65 = ssub.s32 %s25, %s37
      %s66 = sor.u32 %s64, %s65
      %p67 = scmp.eq.s32.totalorder %s66, 0
      %s69 = sadd.s32 %s68, 1
      %s70 = scalar_select %p67, %s68, %s69
      %p73 = pneg %p67
      %p74 = scmp.eq.s32.totalorder %s18, 1
      %p75 = por %p73, %p74
      %p76 = scmp.ne.s32.totalorder %s68, %s71
      %p77 = scmp.eq.s32.totalorder %s18, 0
      %p78 = por %p76, %p77
      %p79 = scmp.ne.s32.totalorder %s68, %s71
      %p80 = scmp.eq.s32.totalorder %s23, 1
      %p81 = por %p79, %p80
      %p82 = scmp.ne.s32.totalorder %s71, %s72
      %p83 = scmp.eq.s32.totalorder %s23, 0
      %p84 = por %p82, %p83
      %p85 = scmp.ne.s32.totalorder %s71, %s72
      %p86 = scmp.eq.s32.totalorder %s24, 1
      %p87 = por %p85, %p86
      %p89 = scmp.ne.s32.totalorder %s72, %s88
      %p90 = scmp.eq.s32.totalorder %s24, 0
      %p91 = por %p89, %p90
      %s92 = ssub.s32 %s26, %s33
      %s93 = ssub.s32 %s25, %s37
      %s94 = sor.u32 %s92, %s93
      %p95 = scmp.eq.s32.totalorder %s94, 0
      %s97 = sadd.s32 %s96, 1
      %s98 = scalar_select %p95, %s96, %s97
      %p101 = pneg %p95
      %p102 = scmp.eq.s32.totalorder %s18, 1
      %p103 = por %p101, %p102
      %p104 = scmp.ne.s32.totalorder %s96, %s99
      %p105 = scmp.eq.s32.totalorder %s18, 0
      %p106 = por %p104, %p105
      %p107 = scmp.ne.s32.totalorder %s96, %s99
      %p108 = scmp.eq.s32.totalorder %s23, 1
      %p109 = por %p107, %p108
      %p110 = scmp.ne.s32.totalorder %s99, %s100
      %p111 = scmp.eq.s32.totalorder %s23, 0
      %p112 = por %p110, %p111
      %p113 = scmp.ne.s32.totalorder %s99, %s100
      %p114 = scmp.eq.s32.totalorder %s24, 1
      %p115 = por %p113, %p114
      %p117 = scmp.ne.s32.totalorder %s100, %s116
      %p118 = scmp.eq.s32.totalorder %s24, 0
      %p119 = por %p117, %p118
      %s120 = ssub.s32 %s26, %s33
      %s121 = ssub.s32 %s25, %s37
      %s122 = sor.u32 %s120, %s121
      %p123 = scmp.eq.s32.totalorder %s122, 0
      %s125 = sadd.s32 %s124, 1
      %s126 = scalar_select %p123, %s124, %s125
      %p129 = pneg %p123
      %p130 = scmp.eq.s32.totalorder %s18, 1
      %p131 = por %p129, %p130
      %p132 = scmp.ne.s32.totalorder %s124, %s127
      %p133 = scmp.eq.s32.totalorder %s18, 0
      %p134 = por %p132, %p133
      %p135 = scmp.ne.s32.totalorder %s124, %s127
      %p136 = scmp.eq.s32.totalorder %s23, 1
      %p137 = por %p135, %p136
      %p138 = scmp.ne.s32.totalorder %s127, %s128
      %p139 = scmp.eq.s32.totalorder %s23, 0
      %p140 = por %p138, %p139
      %p141 = scmp.ne.s32.totalorder %s127, %s128
      %p142 = scmp.eq.s32.totalorder %s24, 1
      %p143 = por %p141, %p142
      %p145 = scmp.ne.s32.totalorder %s128, %s144
      %p146 = scmp.eq.s32.totalorder %s24, 0
      %p147 = por %p145, %p146
      %p148 = scmp.le.s32.totalorder 1, %s18
      %p149 = scmp.lt.s32.totalorder %s18, 3
      %p150 = pnand %p148, %p149
      %p151 = pneg %p150
      // Predicated region
      $region9: #{tpu_custom_call.1} parent=5 // pred_check
        _
      $region10: #{tpu_custom_call.1} parent=5 // pred_check_branch
        %153 = sbr.rel (%p150) target = $region12
      $region11: #{tpu_custom_call.1} parent=5 // pred_region
        %s154 = ssub.s32 %s18, 1
      $region12: #{tpu_custom_call.1} parent=5 // pred_fallthru
        _
      %p155 = scmp.lt.s32.totalorder %s18, 2
      // Predicated region
      $region13: #{tpu_custom_call.1} parent=5 // pred_check
        %p156 = pneg %p155
      $region14: #{tpu_custom_call.1} parent=5 // pred_check_branch
        %158 = sbr.rel (%p156) target = $region16
      $region15: #{tpu_custom_call.1} parent=5 // pred_region
        // Predicated region
        $region17: #{tpu_custom_call.1} parent=15 // pred_check
          %p159 = pneg %p50
        $region18: #{tpu_custom_call.1} parent=15 // pred_check_branch
          %161 = sbr.rel (%p159) target = $region20
        $region19: #{tpu_custom_call.1} parent=15 // pred_region
          %s162 = sand.u32 %s40, 1
          %s163 = scalar_lea.sflag [#allocation3], %s162
          %s164 = sand.u32 %s40, 1
          %s165 = smul.addr %s164, 72
          %s166 = scalar_lea.vmem [#allocation2], %s165
          %s168 = ssub.s32 1152, 1152
          %169 = vsyncadd %s163, %s168
          %s170 = smul.addr %s25, 32
          %s171 = scalar_lea.hbm %s0, %s170
          %s172 = sshll.u32 %s166, 4
          %s173 = int_to_ptr.vmem [resolvable:$true] %s172
          %178 = dma.hbm_to_vmem [thread:$0]  %s171, 1152, %s173, %s163, 64, 32, 2
        $region20: #{tpu_custom_call.1} parent=15 // pred_fallthru
          _
        // Predicated region
        $region21: #{tpu_custom_call.1} parent=15 // pred_check
          %p179 = pneg %p78
        $region22: #{tpu_custom_call.1} parent=15 // pred_check_branch
          %181 = sbr.rel (%p179) target = $region24
        $region23: #{tpu_custom_call.1} parent=15 // pred_region
          %s182 = sand.u32 %s18, 1
          %s183 = scalar_lea.sflag [#allocation6], %s182
          %s184 = sand.u32 %s68, 1
          %s185 = smul.addr %s184, 288
          %s186 = scalar_lea.vmem [#allocation5], %s185
          %s188 = ssub.s32 4608, 4608
          %189 = vsyncadd %s183, %s188
          %s190 = smul.addr %s26, 2
          %s191 = sadd.s32 %s25, %s190
          %s192 = smul.addr %s191, 128
          %s193 = scalar_lea.hbm %s1, %s192
          %s194 = sshll.u32 %s186, 4
          %s195 = int_to_ptr.vmem [resolvable:$true] %s194
          %200 = dma.hbm_to_vmem [thread:$0]  %s193, 4608, %s195, %s183, 256, 128, 8
        $region24: #{tpu_custom_call.1} parent=15 // pred_fallthru
          _
        // Predicated region
        $region25: #{tpu_custom_call.1} parent=15 // pred_check
          %p201 = pneg %p106
        $region26: #{tpu_custom_call.1} parent=15 // pred_check_branch
          %203 = sbr.rel (%p201) target = $region28
        $region27: #{tpu_custom_call.1} parent=15 // pred_region
          %s204 = sand.u32 %s18, 1
          %s205 = scalar_lea.sflag [#allocation6], %s204
          %s206 = sand.u32 %s96, 1
          %s207 = smul.addr %s206, 8
          %s208 = scalar_lea.vmem [#allocation7], %s207
          %s210 = ssub.s32 128, 128
          %211 = vsyncadd %s205, %s210
          %s212 = smul.addr %s26, 2
          %s213 = sadd.s32 %s25, %s212
          %s214 = smul.addr %s213, 128
          %s215 = scalar_lea.hbm %s2, %s214
          %s217 = sshll.u32 %s208, 4
          %s218 = int_to_ptr.vmem [resolvable:$true] %s217
          %220 = dma.hbm_to_vmem [thread:$0]  %s215, 128, %s218, %s205
        $region28: #{tpu_custom_call.1} parent=15 // pred_fallthru
          _
      $region16: #{tpu_custom_call.1} parent=5 // pred_fallthru
        _
      %p221 = scmp.le.s32.totalorder 1, %s18
      %p222 = scmp.lt.s32.totalorder %s18, 3
      %p223 = pnand %p221, %p222
      %p224 = pneg %p223
      // Predicated region
      $region29: #{tpu_custom_call.1} parent=5 // pred_check
        _
      $region30: #{tpu_custom_call.1} parent=5 // pred_check_branch
        %226 = sbr.rel (%p223) target = $region32
      $region31: #{tpu_custom_call.1} parent=5 // pred_region
        %s227 = ssub.s32 %s18, 1
        %s228 = sand.u32 %s43, 1
        %s229 = scalar_lea.sflag [#allocation3], %s228
        %s230 = sand.u32 %s43, 1
        %s231 = smul.addr %s230, 72
        %s232 = scalar_lea.vmem [#allocation2], %s231
        // Predicated region
        $region33: #{tpu_custom_call.1} parent=31 // pred_check
          %p233 = pneg %p56
        $region34: #{tpu_custom_call.1} parent=31 // pred_check_branch
          %235 = sbr.rel (%p233) target = $region36
        $region35: #{tpu_custom_call.1} parent=31 // pred_region
          %236 = dma.done %s229, 1152
        $region36: #{tpu_custom_call.1} parent=31 // pred_fallthru
          _
        %s237 = sand.u32 %s23, 1
        %s238 = scalar_lea.sflag [#allocation6], %s237
        %s239 = sand.u32 %s71, 1
        %s240 = smul.addr %s239, 288
        %s241 = scalar_lea.vmem [#allocation5], %s240
        // Predicated region
        $region37: #{tpu_custom_call.1} parent=31 // pred_check
          %p242 = pneg %p84
        $region38: #{tpu_custom_call.1} parent=31 // pred_check_branch
          %244 = sbr.rel (%p242) target = $region40
        $region39: #{tpu_custom_call.1} parent=31 // pred_region
          %245 = dma.done %s238, 4608
        $region40: #{tpu_custom_call.1} parent=31 // pred_fallthru
          _
        %s246 = sand.u32 %s23, 1
        %s247 = scalar_lea.sflag [#allocation6], %s246
        %s248 = sand.u32 %s99, 1
        %s249 = smul.addr %s248, 8
        %s250 = scalar_lea.vmem [#allocation7], %s249
        // Predicated region
        $region41: #{tpu_custom_call.1} parent=31 // pred_check
          %p251 = pneg %p112
        $region42: #{tpu_custom_call.1} parent=31 // pred_check_branch
          %253 = sbr.rel (%p251) target = $region44
        $region43: #{tpu_custom_call.1} parent=31 // pred_region
          %254 = dma.done %s247, 128
        $region44: #{tpu_custom_call.1} parent=31 // pred_fallthru
          _
        %s255 = sand.u32 %s43, 1
        %s256 = scalar_lea.sflag [#allocation3], %s255
        %s257 = sand.u32 %s43, 1
        %s258 = smul.addr %s257, 72
        %s259 = scalar_lea.vmem [#allocation2], %s258
        %p260 = pneg %p56
        %p261 = pneg %p53
        %s262 = sand.u32 %s23, 1
        %s263 = scalar_lea.sflag [#allocation6], %s262
        %s264 = sand.u32 %s71, 1
        %s265 = smul.addr %s264, 288
        %s266 = scalar_lea.vmem [#allocation5], %s265
        %p267 = pneg %p84
        %p268 = pneg %p81
        %s269 = sand.u32 %s23, 1
        %s270 = scalar_lea.sflag [#allocation6], %s269
        %s271 = sand.u32 %s99, 1
        %s272 = smul.addr %s271, 8
        %s273 = scalar_lea.vmem [#allocation7], %s272
        %p274 = pneg %p112
        %p275 = pneg %p109
        %p276 = pneg %p140
        %p277 = pneg %p137
        %s278 = sand.u32 %s127, 1
        %s279 = scalar_lea.sflag [#allocation4], %s278
        %s280 = sand.u32 %s127, 1
        %s281 = smul.addr %s280, 16
        %s282 = scalar_lea.vmem [#allocation8], %s281
        %v283 = vld [vmem:[%s250] sm:$0xff]
        %v284 = vld [vmem:[%s232] sm:$0x3]
        %v285 = vld [vmem:[%s241] sm:$0xff]
        %v288 = vunpack.c.l.s4 1966171168
        %v289 = vunpack.c.0.s8 %v288
        %v290 = vlaneseq
        %v291 = vshrl.u32 %v290, 7
        %v292 = vsub.s32 %v289, %v291
        %v293 = vrot.slane %v284, %v292
        %v294 = vcombine.high %v293, %v293
        %v296 = vunpack.c.l.s4 1966171168
        %v297 = vunpack.c.0.s8 %v296
        %v298 = vlaneseq
        %v299 = vshrl.u32 %v298, 7
        %v300 = vsub.s32 %v297, %v299
        %v301 = vrot.slane %v293, %v300
        %v303 = vunpack.c.l.s4 1966171168
        %v304 = vunpack.c.0.s8 %v303
        %v305 = vlaneseq
        %v306 = vshrl.u32 %v305, 7
        %v307 = vsub.s32 %v304, %v306
        %v308 = vrot.slane %v294, %v307
        %v309 = vlaneseq
        %v310 = vshrl.u32 %v309, 7
        %v311 = vsub.s32 0, %v310
        %v312 = vrot.slane %v301, %v311
        %v313 = vlaneseq
        %v314 = vshrl.u32 %v313, 7
        %v315 = vsub.s32 0, %v314
        %v316 = vrot.slane %v308, %v315
        %v319 = vmul.f32 %v312, %v285
        %v320 = vmul.f32 %v316, %v285
        %v321 = vadd.f32 %v283, %v319
        %v322 = vadd.f32 %v283, %v320
        %s323 = scalar_lea.vmem %s232, 2 [#allocation2]
        %v324 = vld [vmem:[%s323] sm:$0x3]
        %s325 = scalar_lea.vmem %s241, 8 [#allocation5]
        %v326 = vld [vmem:[%s325] sm:$0xff]
        %v329 = vunpack.c.l.s4 1966171168
        %v330 = vunpack.c.0.s8 %v329
        %v331 = vlaneseq
        %v332 = vshrl.u32 %v331, 7
        %v333 = vsub.s32 %v330, %v332
        %v334 = vrot.slane %v324, %v333
        %v335 = vcombine.high %v334, %v334
        %v337 = vunpack.c.l.s4 1966171168
        %v338 = vunpack.c.0.s8 %v337
        %v339 = vlaneseq
        %v340 = vshrl.u32 %v339, 7
        %v341 = vsub.s32 %v338, %v340
        %v342 = vrot.slane %v334, %v341
        %v344 = vunpack.c.l.s4 1966171168
        %v345 = vunpack.c.0.s8 %v344
        %v346 = vlaneseq
        %v347 = vshrl.u32 %v346, 7
        %v348 = vsub.s32 %v345, %v347
        %v349 = vrot.slane %v335, %v348
        %v350 = vlaneseq
        %v351 = vshrl.u32 %v350, 7
        %v352 = vsub.s32 0, %v351
        %v353 = vrot.slane %v342, %v352
        %v354 = vlaneseq
        %v355 = vshrl.u32 %v354, 7
        %v356 = vsub.s32 0, %v355
        %v357 = vrot.slane %v349, %v356
        %v360 = vmul.f32 %v353, %v326
        %v361 = vmul.f32 %v357, %v326
        %v362 = vadd.f32 %v321, %v360
        %v363 = vadd.f32 %v322, %v361
        %s364 = scalar_lea.vmem %s232, 4 [#allocation2]
        %v365 = vld [vmem:[%s364] sm:$0x3]
        %s366 = scalar_lea.vmem %s241, 16 [#allocation5]
        %v367 = vld [vmem:[%s366] sm:$0xff]
        %v370 = vunpack.c.l.s4 1966171168
        %v371 = vunpack.c.0.s8 %v370
        %v372 = vlaneseq
        %v373 = vshrl.u32 %v372, 7
        %v374 = vsub.s32 %v371, %v373
        %v375 = vrot.slane %v365, %v374
        %v376 = vcombine.high %v375, %v375
        %v378 = vunpack.c.l.s4 1966171168
        %v379 = vunpack.c.0.s8 %v378
        %v380 = vlaneseq
        %v381 = vshrl.u32 %v380, 7
        %v382 = vsub.s32 %v379, %v381
        %v383 = vrot.slane %v375, %v382
        %v385 = vunpack.c.l.s4 1966171168
        %v386 = vunpack.c.0.s8 %v385
        %v387 = vlaneseq
        %v388 = vshrl.u32 %v387, 7
        %v389 = vsub.s32 %v386, %v388
        %v390 = vrot.slane %v376, %v389
        %v391 = vlaneseq
        %v392 = vshrl.u32 %v391, 7
        %v393 = vsub.s32 0, %v392
        %v394 = vrot.slane %v383, %v393
        %v395 = vlaneseq
        %v396 = vshrl.u32 %v395, 7
        %v397 = vsub.s32 0, %v396
        %v398 = vrot.slane %v390, %v397
        %v401 = vmul.f32 %v394, %v367
        %v402 = vmul.f32 %v398, %v367
        %v403 = vadd.f32 %v362, %v401
        %v404 = vadd.f32 %v363, %v402
        %s405 = scalar_lea.vmem %s232, 6 [#allocation2]
        %v406 = vld [vmem:[%s405] sm:$0x3]
        %s407 = scalar_lea.vmem %s241, 24 [#allocation5]
        %v408 = vld [vmem:[%s407] sm:$0xff]
        %v411 = vunpack.c.l.s4 1966171168
        %v412 = vunpack.c.0.s8 %v411
        %v413 = vlaneseq
        %v414 = vshrl.u32 %v413, 7
        %v415 = vsub.s32 %v412, %v414
        %v416 = vrot.slane %v406, %v415
        %v417 = vcombine.high %v416, %v416
        %v419 = vunpack.c.l.s4 1966171168
        %v420 = vunpack.c.0.s8 %v419
        %v421 = vlaneseq
        %v422 = vshrl.u32 %v421, 7
        %v423 = vsub.s32 %v420, %v422
        %v424 = vrot.slane %v416, %v423
        %v426 = vunpack.c.l.s4 1966171168
        %v427 = vunpack.c.0.s8 %v426
        %v428 = vlaneseq
        %v429 = vshrl.u32 %v428, 7
        %v430 = vsub.s32 %v427, %v429
        %v431 = vrot.slane %v417, %v430
        %v432 = vlaneseq
        %v433 = vshrl.u32 %v432, 7
        %v434 = vsub.s32 0, %v433
        %v435 = vrot.slane %v424, %v434
        %v436 = vlaneseq
        %v437 = vshrl.u32 %v436, 7
        %v438 = vsub.s32 0, %v437
        %v439 = vrot.slane %v431, %v438
        %v442 = vmul.f32 %v435, %v408
        %v443 = vmul.f32 %v439, %v408
        %v444 = vadd.f32 %v403, %v442
        %v445 = vadd.f32 %v404, %v443
        %s446 = scalar_lea.vmem %s232, 8 [#allocation2]
        %v447 = vld [vmem:[%s446] sm:$0x3]
        %s448 = scalar_lea.vmem %s241, 32 [#allocation5]
        %v449 = vld [vmem:[%s448] sm:$0xff]
        %v452 = vunpack.c.l.s4 1966171168
        %v453 = vunpack.c.0.s8 %v452
        %v454 = vlaneseq
        %v455 = vshrl.u32 %v454, 7
        %v456 = vsub.s32 %v453, %v455
        %v457 = vrot.slane %v447, %v456
        %v458 = vcombine.high %v457, %v457
        %v460 = vunpack.c.l.s4 1966171168
        %v461 = vunpack.c.0.s8 %v460
        %v462 = vlaneseq
        %v463 = vshrl.u32 %v462, 7
        %v464 = vsub.s32 %v461, %v463
        %v465 = vrot.slane %v457, %v464
        %v467 = vunpack.c.l.s4 1966171168
        %v468 = vunpack.c.0.s8 %v467
        %v469 = vlaneseq
        %v470 = vshrl.u32 %v469, 7
        %v471 = vsub.s32 %v468, %v470
        %v472 = vrot.slane %v458, %v471
        %v473 = vlaneseq
        %v474 = vshrl.u32 %v473, 7
        %v475 = vsub.s32 0, %v474
        %v476 = vrot.slane %v465, %v475
        %v477 = vlaneseq
        %v478 = vshrl.u32 %v477, 7
        %v479 = vsub.s32 0, %v478
        %v480 = vrot.slane %v472, %v479
        %v483 = vmul.f32 %v476, %v449
        %v484 = vmul.f32 %v480, %v449
        %v485 = vadd.f32 %v444, %v483
        %v486 = vadd.f32 %v445, %v484
        %s487 = scalar_lea.vmem %s232, 10 [#allocation2]
        %v488 = vld [vmem:[%s487] sm:$0x3]
        %s489 = scalar_lea.vmem %s241, 40 [#allocation5]
        %v490 = vld [vmem:[%s489] sm:$0xff]
        %v493 = vunpack.c.l.s4 1966171168
        %v494 = vunpack.c.0.s8 %v493
        %v495 = vlaneseq
        %v496 = vshrl.u32 %v495, 7
        %v497 = vsub.s32 %v494, %v496
        %v498 = vrot.slane %v488, %v497
        %v499 = vcombine.high %v498, %v498
        %v501 = vunpack.c.l.s4 1966171168
        %v502 = vunpack.c.0.s8 %v501
        %v503 = vlaneseq
        %v504 = vshrl.u32 %v503, 7
        %v505 = vsub.s32 %v502, %v504
        %v506 = vrot.slane %v498, %v505
        %v508 = vunpack.c.l.s4 1966171168
        %v509 = vunpack.c.0.s8 %v508
        %v510 = vlaneseq
        %v511 = vshrl.u32 %v510, 7
        %v512 = vsub.s32 %v509, %v511
        %v513 = vrot.slane %v499, %v512
        %v514 = vlaneseq
        %v515 = vshrl.u32 %v514, 7
        %v516 = vsub.s32 0, %v515
        %v517 = vrot.slane %v506, %v516
        %v518 = vlaneseq
        %v519 = vshrl.u32 %v518, 7
        %v520 = vsub.s32 0, %v519
        %v521 = vrot.slane %v513, %v520
        %v524 = vmul.f32 %v517, %v490
        %v525 = vmul.f32 %v521, %v490
        %v526 = vadd.f32 %v485, %v524
        %v527 = vadd.f32 %v486, %v525
        %s528 = scalar_lea.vmem %s232, 12 [#allocation2]
        %v529 = vld [vmem:[%s528] sm:$0x3]
        %s530 = scalar_lea.vmem %s241, 48 [#allocation5]
        %v531 = vld [vmem:[%s530] sm:$0xff]
        %v534 = vunpack.c.l.s4 1966171168
        %v535 = vunpack.c.0.s8 %v534
        %v536 = vlaneseq
        %v537 = vshrl.u32 %v536, 7
        %v538 = vsub.s32 %v535, %v537
        %v539 = vrot.slane %v529, %v538
        %v540 = vcombine.high %v539, %v539
        %v542 = vunpack.c.l.s4 1966171168
        %v543 = vunpack.c.0.s8 %v542
        %v544 = vlaneseq
        %v545 = vshrl.u32 %v544, 7
        %v546 = vsub.s32 %v543, %v545
        %v547 = vrot.slane %v539, %v546
        %v549 = vunpack.c.l.s4 1966171168
        %v550 = vunpack.c.0.s8 %v549
        %v551 = vlaneseq
        %v552 = vshrl.u32 %v551, 7
        %v553 = vsub.s32 %v550, %v552
        %v554 = vrot.slane %v540, %v553
        %v555 = vlaneseq
        %v556 = vshrl.u32 %v555, 7
        %v557 = vsub.s32 0, %v556
        %v558 = vrot.slane %v547, %v557
        %v559 = vlaneseq
        %v560 = vshrl.u32 %v559, 7
        %v561 = vsub.s32 0, %v560
        %v562 = vrot.slane %v554, %v561
        %v565 = vmul.f32 %v558, %v531
        %v566 = vmul.f32 %v562, %v531
        %v567 = vadd.f32 %v526, %v565
        %v568 = vadd.f32 %v527, %v566
        %s569 = scalar_lea.vmem %s232, 14 [#allocation2]
        %v570 = vld [vmem:[%s569] sm:$0x3]
        %s571 = scalar_lea.vmem %s241, 56 [#allocation5]
        %v572 = vld [vmem:[%s571] sm:$0xff]
        %v575 = vunpack.c.l.s4 1966171168
        %v576 = vunpack.c.0.s8 %v575
        %v577 = vlaneseq
        %v578 = vshrl.u32 %v577, 7
        %v579 = vsub.s32 %v576, %v578
        %v580 = vrot.slane %v570, %v579
        %v581 = vcombine.high %v580, %v580
        %v583 = vunpack.c.l.s4 1966171168
        %v584 = vunpack.c.0.s8 %v583
        %v585 = vlaneseq
        %v586 = vshrl.u32 %v585, 7
        %v587 = vsub.s32 %v584, %v586
        %v588 = vrot.slane %v580, %v587
        %v590 = vunpack.c.l.s4 1966171168
        %v591 = vunpack.c.0.s8 %v590
        %v592 = vlaneseq
        %v593 = vshrl.u32 %v592, 7
        %v594 = vsub.s32 %v591, %v593
        %v595 = vrot.slane %v581, %v594
        %v596 = vlaneseq
        %v597 = vshrl.u32 %v596, 7
        %v598 = vsub.s32 0, %v597
        %v599 = vrot.slane %v588, %v598
        %v600 = vlaneseq
        %v601 = vshrl.u32 %v600, 7
        %v602 = vsub.s32 0, %v601
        %v603 = vrot.slane %v595, %v602
        %v606 = vmul.f32 %v599, %v572
        %v607 = vmul.f32 %v603, %v572
        %v608 = vadd.f32 %v567, %v606
        %v609 = vadd.f32 %v568, %v607
        %s610 = scalar_lea.vmem %s232, 16 [#allocation2]
        %v611 = vld [vmem:[%s610] sm:$0x3]
        %s612 = scalar_lea.vmem %s241, 64 [#allocation5]
        %v613 = vld [vmem:[%s612] sm:$0xff]
        %v616 = vunpack.c.l.s4 1966171168
        %v617 = vunpack.c.0.s8 %v616
        %v618 = vlaneseq
        %v619 = vshrl.u32 %v618, 7
        %v620 = vsub.s32 %v617, %v619
        %v621 = vrot.slane %v611, %v620
        %v622 = vcombine.high %v621, %v621
        %v624 = vunpack.c.l.s4 1966171168
        %v625 = vunpack.c.0.s8 %v624
        %v626 = vlaneseq
        %v627 = vshrl.u32 %v626, 7
        %v628 = vsub.s32 %v625, %v627
        %v629 = vrot.slane %v621, %v628
        %v631 = vunpack.c.l.s4 1966171168
        %v632 = vunpack.c.0.s8 %v631
        %v633 = vlaneseq
        %v634 = vshrl.u32 %v633, 7
        %v635 = vsub.s32 %v632, %v634
        %v636 = vrot.slane %v622, %v635
        %v637 = vlaneseq
        %v638 = vshrl.u32 %v637, 7
        %v639 = vsub.s32 0, %v638
        %v640 = vrot.slane %v629, %v639
        %v641 = vlaneseq
        %v642 = vshrl.u32 %v641, 7
        %v643 = vsub.s32 0, %v642
        %v644 = vrot.slane %v636, %v643
        %v647 = vmul.f32 %v640, %v613
        %v648 = vmul.f32 %v644, %v613
        %v649 = vadd.f32 %v608, %v647
        %v650 = vadd.f32 %v609, %v648
        %s651 = scalar_lea.vmem %s232, 18 [#allocation2]
        %v652 = vld [vmem:[%s651] sm:$0x3]
        %s653 = scalar_lea.vmem %s241, 72 [#allocation5]
        %v654 = vld [vmem:[%s653] sm:$0xff]
        %v657 = vunpack.c.l.s4 1966171168
        %v658 = vunpack.c.0.s8 %v657
        %v659 = vlaneseq
        %v660 = vshrl.u32 %v659, 7
        %v661 = vsub.s32 %v658, %v660
        %v662 = vrot.slane %v652, %v661
        %v663 = vcombine.high %v662, %v662
        %v665 = vunpack.c.l.s4 1966171168
        %v666 = vunpack.c.0.s8 %v665
        %v667 = vlaneseq
        %v668 = vshrl.u32 %v667, 7
        %v669 = vsub.s32 %v666, %v668
        %v670 = vrot.slane %v662, %v669
        %v672 = vunpack.c.l.s4 1966171168
        %v673 = vunpack.c.0.s8 %v672
        %v674 = vlaneseq
        %v675 = vshrl.u32 %v674, 7
        %v676 = vsub.s32 %v673, %v675
        %v677 = vrot.slane %v663, %v676
        %v678 = vlaneseq
        %v679 = vshrl.u32 %v678, 7
        %v680 = vsub.s32 0, %v679
        %v681 = vrot.slane %v670, %v680
        %v682 = vlaneseq
        %v683 = vshrl.u32 %v682, 7
        %v684 = vsub.s32 0, %v683
        %v685 = vrot.slane %v677, %v684
        %v688 = vmul.f32 %v681, %v654
        %v689 = vmul.f32 %v685, %v654
        %v690 = vadd.f32 %v649, %v688
        %v691 = vadd.f32 %v650, %v689
        %s692 = scalar_lea.vmem %s232, 20 [#allocation2]
        %v693 = vld [vmem:[%s692] sm:$0x3]
        %s694 = scalar_lea.vmem %s241, 80 [#allocation5]
        %v695 = vld [vmem:[%s694] sm:$0xff]
        %v698 = vunpack.c.l.s4 1966171168
        %v699 = vunpack.c.0.s8 %v698
        %v700 = vlaneseq
        %v701 = vshrl.u32 %v700, 7
        %v702 = vsub.s32 %v699, %v701
        %v703 = vrot.slane %v693, %v702
        %v704 = vcombine.high %v703, %v703
        %v706 = vunpack.c.l.s4 1966171168
        %v707 = vunpack.c.0.s8 %v706
        %v708 = vlaneseq
        %v709 = vshrl.u32 %v708, 7
        %v710 = vsub.s32 %v707, %v709
        %v711 = vrot.slane %v703, %v710
        %v713 = vunpack.c.l.s4 1966171168
        %v714 = vunpack.c.0.s8 %v713
        %v715 = vlaneseq
        %v716 = vshrl.u32 %v715, 7
        %v717 = vsub.s32 %v714, %v716
        %v718 = vrot.slane %v704, %v717
        %v719 = vlaneseq
        %v720 = vshrl.u32 %v719, 7
        %v721 = vsub.s32 0, %v720
        %v722 = vrot.slane %v711, %v721
        %v723 = vlaneseq
        %v724 = vshrl.u32 %v723, 7
        %v725 = vsub.s32 0, %v724
        %v726 = vrot.slane %v718, %v725
        %v729 = vmul.f32 %v722, %v695
        %v730 = vmul.f32 %v726, %v695
        %v731 = vadd.f32 %v690, %v729
        %v732 = vadd.f32 %v691, %v730
        %s733 = scalar_lea.vmem %s232, 22 [#allocation2]
        %v734 = vld [vmem:[%s733] sm:$0x3]
        %s735 = scalar_lea.vmem %s241, 88 [#allocation5]
        %v736 = vld [vmem:[%s735] sm:$0xff]
        %v739 = vunpack.c.l.s4 1966171168
        %v740 = vunpack.c.0.s8 %v739
        %v741 = vlaneseq
        %v742 = vshrl.u32 %v741, 7
        %v743 = vsub.s32 %v740, %v742
        %v744 = vrot.slane %v734, %v743
        %v745 = vcombine.high %v744, %v744
        %v747 = vunpack.c.l.s4 1966171168
        %v748 = vunpack.c.0.s8 %v747
        %v749 = vlaneseq
        %v750 = vshrl.u32 %v749, 7
        %v751 = vsub.s32 %v748, %v750
        %v752 = vrot.slane %v744, %v751
        %v754 = vunpack.c.l.s4 1966171168
        %v755 = vunpack.c.0.s8 %v754
        %v756 = vlaneseq
        %v757 = vshrl.u32 %v756, 7
        %v758 = vsub.s32 %v755, %v757
        %v759 = vrot.slane %v745, %v758
        %v760 = vlaneseq
        %v761 = vshrl.u32 %v760, 7
        %v762 = vsub.s32 0, %v761
        %v763 = vrot.slane %v752, %v762
        %v764 = vlaneseq
        %v765 = vshrl.u32 %v764, 7
        %v766 = vsub.s32 0, %v765
        %v767 = vrot.slane %v759, %v766
        %v770 = vmul.f32 %v763, %v736
        %v771 = vmul.f32 %v767, %v736
        %v772 = vadd.f32 %v731, %v770
        %v773 = vadd.f32 %v732, %v771
        %s774 = scalar_lea.vmem %s232, 24 [#allocation2]
        %v775 = vld [vmem:[%s774] sm:$0x3]
        %s776 = scalar_lea.vmem %s241, 96 [#allocation5]
        %v777 = vld [vmem:[%s776] sm:$0xff]
        %v780 = vunpack.c.l.s4 1966171168
        %v781 = vunpack.c.0.s8 %v780
        %v782 = vlaneseq
        %v783 = vshrl.u32 %v782, 7
        %v784 = vsub.s32 %v781, %v783
        %v785 = vrot.slane %v775, %v784
        %v786 = vcombine.high %v785, %v785
        %v788 = vunpack.c.l.s4 1966171168
        %v789 = vunpack.c.0.s8 %v788
        %v790 = vlaneseq
        %v791 = vshrl.u32 %v790, 7
        %v792 = vsub.s32 %v789, %v791
        %v793 = vrot.slane %v785, %v792
        %v795 = vunpack.c.l.s4 1966171168
        %v796 = vunpack.c.0.s8 %v795
        %v797 = vlaneseq
        %v798 = vshrl.u32 %v797, 7
        %v799 = vsub.s32 %v796, %v798
        %v800 = vrot.slane %v786, %v799
        %v801 = vlaneseq
        %v802 = vshrl.u32 %v801, 7
        %v803 = vsub.s32 0, %v802
        %v804 = vrot.slane %v793, %v803
        %v805 = vlaneseq
        %v806 = vshrl.u32 %v805, 7
        %v807 = vsub.s32 0, %v806
        %v808 = vrot.slane %v800, %v807
        %v811 = vmul.f32 %v804, %v777
        %v812 = vmul.f32 %v808, %v777
        %v813 = vadd.f32 %v772, %v811
        %v814 = vadd.f32 %v773, %v812
        %s815 = scalar_lea.vmem %s232, 26 [#allocation2]
        %v816 = vld [vmem:[%s815] sm:$0x3]
        %s817 = scalar_lea.vmem %s241, 104 [#allocation5]
        %v818 = vld [vmem:[%s817] sm:$0xff]
        %v821 = vunpack.c.l.s4 1966171168
        %v822 = vunpack.c.0.s8 %v821
        %v823 = vlaneseq
        %v824 = vshrl.u32 %v823, 7
        %v825 = vsub.s32 %v822, %v824
        %v826 = vrot.slane %v816, %v825
        %v827 = vcombine.high %v826, %v826
        %v829 = vunpack.c.l.s4 1966171168
        %v830 = vunpack.c.0.s8 %v829
        %v831 = vlaneseq
        %v832 = vshrl.u32 %v831, 7
        %v833 = vsub.s32 %v830, %v832
        %v834 = vrot.slane %v826, %v833
        %v836 = vunpack.c.l.s4 1966171168
        %v837 = vunpack.c.0.s8 %v836
        %v838 = vlaneseq
        %v839 = vshrl.u32 %v838, 7
        %v840 = vsub.s32 %v837, %v839
        %v841 = vrot.slane %v827, %v840
        %v842 = vlaneseq
        %v843 = vshrl.u32 %v842, 7
        %v844 = vsub.s32 0, %v843
        %v845 = vrot.slane %v834, %v844
        %v846 = vlaneseq
        %v847 = vshrl.u32 %v846, 7
        %v848 = vsub.s32 0, %v847
        %v849 = vrot.slane %v841, %v848
        %v852 = vmul.f32 %v845, %v818
        %v853 = vmul.f32 %v849, %v818
        %v854 = vadd.f32 %v813, %v852
        %v855 = vadd.f32 %v814, %v853
        %s856 = scalar_lea.vmem %s232, 28 [#allocation2]
        %v857 = vld [vmem:[%s856] sm:$0x3]
        %s858 = scalar_lea.vmem %s241, 112 [#allocation5]
        %v859 = vld [vmem:[%s858] sm:$0xff]
        %v862 = vunpack.c.l.s4 1966171168
        %v863 = vunpack.c.0.s8 %v862
        %v864 = vlaneseq
        %v865 = vshrl.u32 %v864, 7
        %v866 = vsub.s32 %v863, %v865
        %v867 = vrot.slane %v857, %v866
        %v868 = vcombine.high %v867, %v867
        %v870 = vunpack.c.l.s4 1966171168
        %v871 = vunpack.c.0.s8 %v870
        %v872 = vlaneseq
        %v873 = vshrl.u32 %v872, 7
        %v874 = vsub.s32 %v871, %v873
        %v875 = vrot.slane %v867, %v874
        %v877 = vunpack.c.l.s4 1966171168
        %v878 = vunpack.c.0.s8 %v877
        %v879 = vlaneseq
        %v880 = vshrl.u32 %v879, 7
        %v881 = vsub.s32 %v878, %v880
        %v882 = vrot.slane %v868, %v881
        %v883 = vlaneseq
        %v884 = vshrl.u32 %v883, 7
        %v885 = vsub.s32 0, %v884
        %v886 = vrot.slane %v875, %v885
        %v887 = vlaneseq
        %v888 = vshrl.u32 %v887, 7
        %v889 = vsub.s32 0, %v888
        %v890 = vrot.slane %v882, %v889
        %v893 = vmul.f32 %v886, %v859
        %v894 = vmul.f32 %v890, %v859
        %v895 = vadd.f32 %v854, %v893
        %v896 = vadd.f32 %v855, %v894
        %s897 = scalar_lea.vmem %s232, 30 [#allocation2]
        %v898 = vld [vmem:[%s897] sm:$0x3]
        %s899 = scalar_lea.vmem %s241, 120 [#allocation5]
        %v900 = vld [vmem:[%s899] sm:$0xff]
        %v903 = vunpack.c.l.s4 1966171168
        %v904 = vunpack.c.0.s8 %v903
        %v905 = vlaneseq
        %v906 = vshrl.u32 %v905, 7
        %v907 = vsub.s32 %v904, %v906
        %v908 = vrot.slane %v898, %v907
        %v909 = vcombine.high %v908, %v908
        %v911 = vunpack.c.l.s4 1966171168
        %v912 = vunpack.c.0.s8 %v911
        %v913 = vlaneseq
        %v914 = vshrl.u32 %v913, 7
        %v915 = vsub.s32 %v912, %v914
        %v916 = vrot.slane %v908, %v915
        %v918 = vunpack.c.l.s4 1966171168
        %v919 = vunpack.c.0.s8 %v918
        %v920 = vlaneseq
        %v921 = vshrl.u32 %v920, 7
        %v922 = vsub.s32 %v919, %v921
        %v923 = vrot.slane %v909, %v922
        %v924 = vlaneseq
        %v925 = vshrl.u32 %v924, 7
        %v926 = vsub.s32 0, %v925
        %v927 = vrot.slane %v916, %v926
        %v928 = vlaneseq
        %v929 = vshrl.u32 %v928, 7
        %v930 = vsub.s32 0, %v929
        %v931 = vrot.slane %v923, %v930
        %v934 = vmul.f32 %v927, %v900
        %v935 = vmul.f32 %v931, %v900
        %v936 = vadd.f32 %v895, %v934
        %v937 = vadd.f32 %v896, %v935
        %s938 = scalar_lea.vmem %s232, 32 [#allocation2]
        %v939 = vld [vmem:[%s938] sm:$0x3]
        %s940 = scalar_lea.vmem %s241, 128 [#allocation5]
        %v941 = vld [vmem:[%s940] sm:$0xff]
        %v944 = vunpack.c.l.s4 1966171168
        %v945 = vunpack.c.0.s8 %v944
        %v946 = vlaneseq
        %v947 = vshrl.u32 %v946, 7
        %v948 = vsub.s32 %v945, %v947
        %v949 = vrot.slane %v939, %v948
        %v950 = vcombine.high %v949, %v949
        %v952 = vunpack.c.l.s4 1966171168
        %v953 = vunpack.c.0.s8 %v952
        %v954 = vlaneseq
        %v955 = vshrl.u32 %v954, 7
        %v956 = vsub.s32 %v953, %v955
        %v957 = vrot.slane %v949, %v956
        %v959 = vunpack.c.l.s4 1966171168
        %v960 = vunpack.c.0.s8 %v959
        %v961 = vlaneseq
        %v962 = vshrl.u32 %v961, 7
        %v963 = vsub.s32 %v960, %v962
        %v964 = vrot.slane %v950, %v963
        %v965 = vlaneseq
        %v966 = vshrl.u32 %v965, 7
        %v967 = vsub.s32 0, %v966
        %v968 = vrot.slane %v957, %v967
        %v969 = vlaneseq
        %v970 = vshrl.u32 %v969, 7
        %v971 = vsub.s32 0, %v970
        %v972 = vrot.slane %v964, %v971
        %v975 = vmul.f32 %v968, %v941
        %v976 = vmul.f32 %v972, %v941
        %v977 = vadd.f32 %v936, %v975
        %v978 = vadd.f32 %v937, %v976
        %s979 = scalar_lea.vmem %s232, 34 [#allocation2]
        %v980 = vld [vmem:[%s979] sm:$0x3]
        %s981 = scalar_lea.vmem %s241, 136 [#allocation5]
        %v982 = vld [vmem:[%s981] sm:$0xff]
        %v985 = vunpack.c.l.s4 1966171168
        %v986 = vunpack.c.0.s8 %v985
        %v987 = vlaneseq
        %v988 = vshrl.u32 %v987, 7
        %v989 = vsub.s32 %v986, %v988
        %v990 = vrot.slane %v980, %v989
        %v991 = vcombine.high %v990, %v990
        %v993 = vunpack.c.l.s4 1966171168
        %v994 = vunpack.c.0.s8 %v993
        %v995 = vlaneseq
        %v996 = vshrl.u32 %v995, 7
        %v997 = vsub.s32 %v994, %v996
        %v998 = vrot.slane %v990, %v997
        %v1000 = vunpack.c.l.s4 1966171168
        %v1001 = vunpack.c.0.s8 %v1000
        %v1002 = vlaneseq
        %v1003 = vshrl.u32 %v1002, 7
        %v1004 = vsub.s32 %v1001, %v1003
        %v1005 = vrot.slane %v991, %v1004
        %v1006 = vlaneseq
        %v1007 = vshrl.u32 %v1006, 7
        %v1008 = vsub.s32 0, %v1007
        %v1009 = vrot.slane %v998, %v1008
        %v1010 = vlaneseq
        %v1011 = vshrl.u32 %v1010, 7
        %v1012 = vsub.s32 0, %v1011
        %v1013 = vrot.slane %v1005, %v1012
        %v1016 = vmul.f32 %v1009, %v982
        %v1017 = vmul.f32 %v1013, %v982
        %v1018 = vadd.f32 %v977, %v1016
        %v1019 = vadd.f32 %v978, %v1017
        %s1020 = scalar_lea.vmem %s232, 36 [#allocation2]
        %v1021 = vld [vmem:[%s1020] sm:$0x3]
        %s1022 = scalar_lea.vmem %s241, 144 [#allocation5]
        %v1023 = vld [vmem:[%s1022] sm:$0xff]
        %v1026 = vunpack.c.l.s4 1966171168
        %v1027 = vunpack.c.0.s8 %v1026
        %v1028 = vlaneseq
        %v1029 = vshrl.u32 %v1028, 7
        %v1030 = vsub.s32 %v1027, %v1029
        %v1031 = vrot.slane %v1021, %v1030
        %v1032 = vcombine.high %v1031, %v1031
        %v1034 = vunpack.c.l.s4 1966171168
        %v1035 = vunpack.c.0.s8 %v1034
        %v1036 = vlaneseq
        %v1037 = vshrl.u32 %v1036, 7
        %v1038 = vsub.s32 %v1035, %v1037
        %v1039 = vrot.slane %v1031, %v1038
        %v1041 = vunpack.c.l.s4 1966171168
        %v1042 = vunpack.c.0.s8 %v1041
        %v1043 = vlaneseq
        %v1044 = vshrl.u32 %v1043, 7
        %v1045 = vsub.s32 %v1042, %v1044
        %v1046 = vrot.slane %v1032, %v1045
        %v1047 = vlaneseq
        %v1048 = vshrl.u32 %v1047, 7
        %v1049 = vsub.s32 0, %v1048
        %v1050 = vrot.slane %v1039, %v1049
        %v1051 = vlaneseq
        %v1052 = vshrl.u32 %v1051, 7
        %v1053 = vsub.s32 0, %v1052
        %v1054 = vrot.slane %v1046, %v1053
        %v1057 = vmul.f32 %v1050, %v1023
        %v1058 = vmul.f32 %v1054, %v1023
        %v1059 = vadd.f32 %v1018, %v1057
        %v1060 = vadd.f32 %v1019, %v1058
        %s1061 = scalar_lea.vmem %s232, 38 [#allocation2]
        %v1062 = vld [vmem:[%s1061] sm:$0x3]
        %s1063 = scalar_lea.vmem %s241, 152 [#allocation5]
        %v1064 = vld [vmem:[%s1063] sm:$0xff]
        %v1067 = vunpack.c.l.s4 1966171168
        %v1068 = vunpack.c.0.s8 %v1067
        %v1069 = vlaneseq
        %v1070 = vshrl.u32 %v1069, 7
        %v1071 = vsub.s32 %v1068, %v1070
        %v1072 = vrot.slane %v1062, %v1071
        %v1073 = vcombine.high %v1072, %v1072
        %v1075 = vunpack.c.l.s4 1966171168
        %v1076 = vunpack.c.0.s8 %v1075
        %v1077 = vlaneseq
        %v1078 = vshrl.u32 %v1077, 7
        %v1079 = vsub.s32 %v1076, %v1078
        %v1080 = vrot.slane %v1072, %v1079
        %v1082 = vunpack.c.l.s4 1966171168
        %v1083 = vunpack.c.0.s8 %v1082
        %v1084 = vlaneseq
        %v1085 = vshrl.u32 %v1084, 7
        %v1086 = vsub.s32 %v1083, %v1085
        %v1087 = vrot.slane %v1073, %v1086
        %v1088 = vlaneseq
        %v1089 = vshrl.u32 %v1088, 7
        %v1090 = vsub.s32 0, %v1089
        %v1091 = vrot.slane %v1080, %v1090
        %v1092 = vlaneseq
        %v1093 = vshrl.u32 %v1092, 7
        %v1094 = vsub.s32 0, %v1093
        %v1095 = vrot.slane %v1087, %v1094
        %v1098 = vmul.f32 %v1091, %v1064
        %v1099 = vmul.f32 %v1095, %v1064
        %v1100 = vadd.f32 %v1059, %v1098
        %v1101 = vadd.f32 %v1060, %v1099
        %s1102 = scalar_lea.vmem %s232, 40 [#allocation2]
        %v1103 = vld [vmem:[%s1102] sm:$0x3]
        %s1104 = scalar_lea.vmem %s241, 160 [#allocation5]
        %v1105 = vld [vmem:[%s1104] sm:$0xff]
        %v1108 = vunpack.c.l.s4 1966171168
        %v1109 = vunpack.c.0.s8 %v1108
        %v1110 = vlaneseq
        %v1111 = vshrl.u32 %v1110, 7
        %v1112 = vsub.s32 %v1109, %v1111
        %v1113 = vrot.slane %v1103, %v1112
        %v1114 = vcombine.high %v1113, %v1113
        %v1116 = vunpack.c.l.s4 1966171168
        %v1117 = vunpack.c.0.s8 %v1116
        %v1118 = vlaneseq
        %v1119 = vshrl.u32 %v1118, 7
        %v1120 = vsub.s32 %v1117, %v1119
        %v1121 = vrot.slane %v1113, %v1120
        %v1123 = vunpack.c.l.s4 1966171168
        %v1124 = vunpack.c.0.s8 %v1123
        %v1125 = vlaneseq
        %v1126 = vshrl.u32 %v1125, 7
        %v1127 = vsub.s32 %v1124, %v1126
        %v1128 = vrot.slane %v1114, %v1127
        %v1129 = vlaneseq
        %v1130 = vshrl.u32 %v1129, 7
        %v1131 = vsub.s32 0, %v1130
        %v1132 = vrot.slane %v1121, %v1131
        %v1133 = vlaneseq
        %v1134 = vshrl.u32 %v1133, 7
        %v1135 = vsub.s32 0, %v1134
        %v1136 = vrot.slane %v1128, %v1135
        %v1139 = vmul.f32 %v1132, %v1105
        %v1140 = vmul.f32 %v1136, %v1105
        %v1141 = vadd.f32 %v1100, %v1139
        %v1142 = vadd.f32 %v1101, %v1140
        %s1143 = scalar_lea.vmem %s232, 42 [#allocation2]
        %v1144 = vld [vmem:[%s1143] sm:$0x3]
        %s1145 = scalar_lea.vmem %s241, 168 [#allocation5]
        %v1146 = vld [vmem:[%s1145] sm:$0xff]
        %v1149 = vunpack.c.l.s4 1966171168
        %v1150 = vunpack.c.0.s8 %v1149
        %v1151 = vlaneseq
        %v1152 = vshrl.u32 %v1151, 7
        %v1153 = vsub.s32 %v1150, %v1152
        %v1154 = vrot.slane %v1144, %v1153
        %v1155 = vcombine.high %v1154, %v1154
        %v1157 = vunpack.c.l.s4 1966171168
        %v1158 = vunpack.c.0.s8 %v1157
        %v1159 = vlaneseq
        %v1160 = vshrl.u32 %v1159, 7
        %v1161 = vsub.s32 %v1158, %v1160
        %v1162 = vrot.slane %v1154, %v1161
        %v1164 = vunpack.c.l.s4 1966171168
        %v1165 = vunpack.c.0.s8 %v1164
        %v1166 = vlaneseq
        %v1167 = vshrl.u32 %v1166, 7
        %v1168 = vsub.s32 %v1165, %v1167
        %v1169 = vrot.slane %v1155, %v1168
        %v1170 = vlaneseq
        %v1171 = vshrl.u32 %v1170, 7
        %v1172 = vsub.s32 0, %v1171
        %v1173 = vrot.slane %v1162, %v1172
        %v1174 = vlaneseq
        %v1175 = vshrl.u32 %v1174, 7
        %v1176 = vsub.s32 0, %v1175
        %v1177 = vrot.slane %v1169, %v1176
        %v1180 = vmul.f32 %v1173, %v1146
        %v1181 = vmul.f32 %v1177, %v1146
        %v1182 = vadd.f32 %v1141, %v1180
        %v1183 = vadd.f32 %v1142, %v1181
        %s1184 = scalar_lea.vmem %s232, 44 [#allocation2]
        %v1185 = vld [vmem:[%s1184] sm:$0x3]
        %s1186 = scalar_lea.vmem %s241, 176 [#allocation5]
        %v1187 = vld [vmem:[%s1186] sm:$0xff]
        %v1190 = vunpack.c.l.s4 1966171168
        %v1191 = vunpack.c.0.s8 %v1190
        %v1192 = vlaneseq
        %v1193 = vshrl.u32 %v1192, 7
        %v1194 = vsub.s32 %v1191, %v1193
        %v1195 = vrot.slane %v1185, %v1194
        %v1196 = vcombine.high %v1195, %v1195
        %v1198 = vunpack.c.l.s4 1966171168
        %v1199 = vunpack.c.0.s8 %v1198
        %v1200 = vlaneseq
        %v1201 = vshrl.u32 %v1200, 7
        %v1202 = vsub.s32 %v1199, %v1201
        %v1203 = vrot.slane %v1195, %v1202
        %v1205 = vunpack.c.l.s4 1966171168
        %v1206 = vunpack.c.0.s8 %v1205
        %v1207 = vlaneseq
        %v1208 = vshrl.u32 %v1207, 7
        %v1209 = vsub.s32 %v1206, %v1208
        %v1210 = vrot.slane %v1196, %v1209
        %v1211 = vlaneseq
        %v1212 = vshrl.u32 %v1211, 7
        %v1213 = vsub.s32 0, %v1212
        %v1214 = vrot.slane %v1203, %v1213
        %v1215 = vlaneseq
        %v1216 = vshrl.u32 %v1215, 7
        %v1217 = vsub.s32 0, %v1216
        %v1218 = vrot.slane %v1210, %v1217
        %v1221 = vmul.f32 %v1214, %v1187
        %v1222 = vmul.f32 %v1218, %v1187
        %v1223 = vadd.f32 %v1182, %v1221
        %v1224 = vadd.f32 %v1183, %v1222
        %s1225 = scalar_lea.vmem %s232, 46 [#allocation2]
        %v1226 = vld [vmem:[%s1225] sm:$0x3]
        %s1227 = scalar_lea.vmem %s241, 184 [#allocation5]
        %v1228 = vld [vmem:[%s1227] sm:$0xff]
        %v1231 = vunpack.c.l.s4 1966171168
        %v1232 = vunpack.c.0.s8 %v1231
        %v1233 = vlaneseq
        %v1234 = vshrl.u32 %v1233, 7
        %v1235 = vsub.s32 %v1232, %v1234
        %v1236 = vrot.slane %v1226, %v1235
        %v1237 = vcombine.high %v1236, %v1236
        %v1239 = vunpack.c.l.s4 1966171168
        %v1240 = vunpack.c.0.s8 %v1239
        %v1241 = vlaneseq
        %v1242 = vshrl.u32 %v1241, 7
        %v1243 = vsub.s32 %v1240, %v1242
        %v1244 = vrot.slane %v1236, %v1243
        %v1246 = vunpack.c.l.s4 1966171168
        %v1247 = vunpack.c.0.s8 %v1246
        %v1248 = vlaneseq
        %v1249 = vshrl.u32 %v1248, 7
        %v1250 = vsub.s32 %v1247, %v1249
        %v1251 = vrot.slane %v1237, %v1250
        %v1252 = vlaneseq
        %v1253 = vshrl.u32 %v1252, 7
        %v1254 = vsub.s32 0, %v1253
        %v1255 = vrot.slane %v1244, %v1254
        %v1256 = vlaneseq
        %v1257 = vshrl.u32 %v1256, 7
        %v1258 = vsub.s32 0, %v1257
        %v1259 = vrot.slane %v1251, %v1258
        %v1262 = vmul.f32 %v1255, %v1228
        %v1263 = vmul.f32 %v1259, %v1228
        %v1264 = vadd.f32 %v1223, %v1262
        %v1265 = vadd.f32 %v1224, %v1263
        %s1266 = scalar_lea.vmem %s232, 48 [#allocation2]
        %v1267 = vld [vmem:[%s1266] sm:$0x3]
        %s1268 = scalar_lea.vmem %s241, 192 [#allocation5]
        %v1269 = vld [vmem:[%s1268] sm:$0xff]
        %v1272 = vunpack.c.l.s4 1966171168
        %v1273 = vunpack.c.0.s8 %v1272
        %v1274 = vlaneseq
        %v1275 = vshrl.u32 %v1274, 7
        %v1276 = vsub.s32 %v1273, %v1275
        %v1277 = vrot.slane %v1267, %v1276
        %v1278 = vcombine.high %v1277, %v1277
        %v1280 = vunpack.c.l.s4 1966171168
        %v1281 = vunpack.c.0.s8 %v1280
        %v1282 = vlaneseq
        %v1283 = vshrl.u32 %v1282, 7
        %v1284 = vsub.s32 %v1281, %v1283
        %v1285 = vrot.slane %v1277, %v1284
        %v1287 = vunpack.c.l.s4 1966171168
        %v1288 = vunpack.c.0.s8 %v1287
        %v1289 = vlaneseq
        %v1290 = vshrl.u32 %v1289, 7
        %v1291 = vsub.s32 %v1288, %v1290
        %v1292 = vrot.slane %v1278, %v1291
        %v1293 = vlaneseq
        %v1294 = vshrl.u32 %v1293, 7
        %v1295 = vsub.s32 0, %v1294
        %v1296 = vrot.slane %v1285, %v1295
        %v1297 = vlaneseq
        %v1298 = vshrl.u32 %v1297, 7
        %v1299 = vsub.s32 0, %v1298
        %v1300 = vrot.slane %v1292, %v1299
        %v1303 = vmul.f32 %v1296, %v1269
        %v1304 = vmul.f32 %v1300, %v1269
        %v1305 = vadd.f32 %v1264, %v1303
        %v1306 = vadd.f32 %v1265, %v1304
        %s1307 = scalar_lea.vmem %s232, 50 [#allocation2]
        %v1308 = vld [vmem:[%s1307] sm:$0x3]
        %s1309 = scalar_lea.vmem %s241, 200 [#allocation5]
        %v1310 = vld [vmem:[%s1309] sm:$0xff]
        %v1313 = vunpack.c.l.s4 1966171168
        %v1314 = vunpack.c.0.s8 %v1313
        %v1315 = vlaneseq
        %v1316 = vshrl.u32 %v1315, 7
        %v1317 = vsub.s32 %v1314, %v1316
        %v1318 = vrot.slane %v1308, %v1317
        %v1319 = vcombine.high %v1318, %v1318
        %v1321 = vunpack.c.l.s4 1966171168
        %v1322 = vunpack.c.0.s8 %v1321
        %v1323 = vlaneseq
        %v1324 = vshrl.u32 %v1323, 7
        %v1325 = vsub.s32 %v1322, %v1324
        %v1326 = vrot.slane %v1318, %v1325
        %v1328 = vunpack.c.l.s4 1966171168
        %v1329 = vunpack.c.0.s8 %v1328
        %v1330 = vlaneseq
        %v1331 = vshrl.u32 %v1330, 7
        %v1332 = vsub.s32 %v1329, %v1331
        %v1333 = vrot.slane %v1319, %v1332
        %v1334 = vlaneseq
        %v1335 = vshrl.u32 %v1334, 7
        %v1336 = vsub.s32 0, %v1335
        %v1337 = vrot.slane %v1326, %v1336
        %v1338 = vlaneseq
        %v1339 = vshrl.u32 %v1338, 7
        %v1340 = vsub.s32 0, %v1339
        %v1341 = vrot.slane %v1333, %v1340
        %v1344 = vmul.f32 %v1337, %v1310
        %v1345 = vmul.f32 %v1341, %v1310
        %v1346 = vadd.f32 %v1305, %v1344
        %v1347 = vadd.f32 %v1306, %v1345
        %s1348 = scalar_lea.vmem %s232, 52 [#allocation2]
        %v1349 = vld [vmem:[%s1348] sm:$0x3]
        %s1350 = scalar_lea.vmem %s241, 208 [#allocation5]
        %v1351 = vld [vmem:[%s1350] sm:$0xff]
        %v1354 = vunpack.c.l.s4 1966171168
        %v1355 = vunpack.c.0.s8 %v1354
        %v1356 = vlaneseq
        %v1357 = vshrl.u32 %v1356, 7
        %v1358 = vsub.s32 %v1355, %v1357
        %v1359 = vrot.slane %v1349, %v1358
        %v1360 = vcombine.high %v1359, %v1359
        %v1362 = vunpack.c.l.s4 1966171168
        %v1363 = vunpack.c.0.s8 %v1362
        %v1364 = vlaneseq
        %v1365 = vshrl.u32 %v1364, 7
        %v1366 = vsub.s32 %v1363, %v1365
        %v1367 = vrot.slane %v1359, %v1366
        %v1369 = vunpack.c.l.s4 1966171168
        %v1370 = vunpack.c.0.s8 %v1369
        %v1371 = vlaneseq
        %v1372 = vshrl.u32 %v1371, 7
        %v1373 = vsub.s32 %v1370, %v1372
        %v1374 = vrot.slane %v1360, %v1373
        %v1375 = vlaneseq
        %v1376 = vshrl.u32 %v1375, 7
        %v1377 = vsub.s32 0, %v1376
        %v1378 = vrot.slane %v1367, %v1377
        %v1379 = vlaneseq
        %v1380 = vshrl.u32 %v1379, 7
        %v1381 = vsub.s32 0, %v1380
        %v1382 = vrot.slane %v1374, %v1381
        %v1385 = vmul.f32 %v1378, %v1351
        %v1386 = vmul.f32 %v1382, %v1351
        %v1387 = vadd.f32 %v1346, %v1385
        %v1388 = vadd.f32 %v1347, %v1386
        %s1389 = scalar_lea.vmem %s232, 54 [#allocation2]
        %v1390 = vld [vmem:[%s1389] sm:$0x3]
        %s1391 = scalar_lea.vmem %s241, 216 [#allocation5]
        %v1392 = vld [vmem:[%s1391] sm:$0xff]
        %v1395 = vunpack.c.l.s4 1966171168
        %v1396 = vunpack.c.0.s8 %v1395
        %v1397 = vlaneseq
        %v1398 = vshrl.u32 %v1397, 7
        %v1399 = vsub.s32 %v1396, %v1398
        %v1400 = vrot.slane %v1390, %v1399
        %v1401 = vcombine.high %v1400, %v1400
        %v1403 = vunpack.c.l.s4 1966171168
        %v1404 = vunpack.c.0.s8 %v1403
        %v1405 = vlaneseq
        %v1406 = vshrl.u32 %v1405, 7
        %v1407 = vsub.s32 %v1404, %v1406
        %v1408 = vrot.slane %v1400, %v1407
        %v1410 = vunpack.c.l.s4 1966171168
        %v1411 = vunpack.c.0.s8 %v1410
        %v1412 = vlaneseq
        %v1413 = vshrl.u32 %v1412, 7
        %v1414 = vsub.s32 %v1411, %v1413
        %v1415 = vrot.slane %v1401, %v1414
        %v1416 = vlaneseq
        %v1417 = vshrl.u32 %v1416, 7
        %v1418 = vsub.s32 0, %v1417
        %v1419 = vrot.slane %v1408, %v1418
        %v1420 = vlaneseq
        %v1421 = vshrl.u32 %v1420, 7
        %v1422 = vsub.s32 0, %v1421
        %v1423 = vrot.slane %v1415, %v1422
        %v1426 = vmul.f32 %v1419, %v1392
        %v1427 = vmul.f32 %v1423, %v1392
        %v1428 = vadd.f32 %v1387, %v1426
        %v1429 = vadd.f32 %v1388, %v1427
        %s1430 = scalar_lea.vmem %s232, 56 [#allocation2]
        %v1431 = vld [vmem:[%s1430] sm:$0x3]
        %s1432 = scalar_lea.vmem %s241, 224 [#allocation5]
        %v1433 = vld [vmem:[%s1432] sm:$0xff]
        %v1436 = vunpack.c.l.s4 1966171168
        %v1437 = vunpack.c.0.s8 %v1436
        %v1438 = vlaneseq
        %v1439 = vshrl.u32 %v1438, 7
        %v1440 = vsub.s32 %v1437, %v1439
        %v1441 = vrot.slane %v1431, %v1440
        %v1442 = vcombine.high %v1441, %v1441
        %v1444 = vunpack.c.l.s4 1966171168
        %v1445 = vunpack.c.0.s8 %v1444
        %v1446 = vlaneseq
        %v1447 = vshrl.u32 %v1446, 7
        %v1448 = vsub.s32 %v1445, %v1447
        %v1449 = vrot.slane %v1441, %v1448
        %v1451 = vunpack.c.l.s4 1966171168
        %v1452 = vunpack.c.0.s8 %v1451
        %v1453 = vlaneseq
        %v1454 = vshrl.u32 %v1453, 7
        %v1455 = vsub.s32 %v1452, %v1454
        %v1456 = vrot.slane %v1442, %v1455
        %v1457 = vlaneseq
        %v1458 = vshrl.u32 %v1457, 7
        %v1459 = vsub.s32 0, %v1458
        %v1460 = vrot.slane %v1449, %v1459
        %v1461 = vlaneseq
        %v1462 = vshrl.u32 %v1461, 7
        %v1463 = vsub.s32 0, %v1462
        %v1464 = vrot.slane %v1456, %v1463
        %v1467 = vmul.f32 %v1460, %v1433
        %v1468 = vmul.f32 %v1464, %v1433
        %v1469 = vadd.f32 %v1428, %v1467
        %v1470 = vadd.f32 %v1429, %v1468
        %s1471 = scalar_lea.vmem %s232, 58 [#allocation2]
        %v1472 = vld [vmem:[%s1471] sm:$0x3]
        %s1473 = scalar_lea.vmem %s241, 232 [#allocation5]
        %v1474 = vld [vmem:[%s1473] sm:$0xff]
        %v1477 = vunpack.c.l.s4 1966171168
        %v1478 = vunpack.c.0.s8 %v1477
        %v1479 = vlaneseq
        %v1480 = vshrl.u32 %v1479, 7
        %v1481 = vsub.s32 %v1478, %v1480
        %v1482 = vrot.slane %v1472, %v1481
        %v1483 = vcombine.high %v1482, %v1482
        %v1485 = vunpack.c.l.s4 1966171168
        %v1486 = vunpack.c.0.s8 %v1485
        %v1487 = vlaneseq
        %v1488 = vshrl.u32 %v1487, 7
        %v1489 = vsub.s32 %v1486, %v1488
        %v1490 = vrot.slane %v1482, %v1489
        %v1492 = vunpack.c.l.s4 1966171168
        %v1493 = vunpack.c.0.s8 %v1492
        %v1494 = vlaneseq
        %v1495 = vshrl.u32 %v1494, 7
        %v1496 = vsub.s32 %v1493, %v1495
        %v1497 = vrot.slane %v1483, %v1496
        %v1498 = vlaneseq
        %v1499 = vshrl.u32 %v1498, 7
        %v1500 = vsub.s32 0, %v1499
        %v1501 = vrot.slane %v1490, %v1500
        %v1502 = vlaneseq
        %v1503 = vshrl.u32 %v1502, 7
        %v1504 = vsub.s32 0, %v1503
        %v1505 = vrot.slane %v1497, %v1504
        %v1508 = vmul.f32 %v1501, %v1474
        %v1509 = vmul.f32 %v1505, %v1474
        %v1510 = vadd.f32 %v1469, %v1508
        %v1511 = vadd.f32 %v1470, %v1509
        %s1512 = scalar_lea.vmem %s232, 60 [#allocation2]
        %v1513 = vld [vmem:[%s1512] sm:$0x3]
        %s1514 = scalar_lea.vmem %s241, 240 [#allocation5]
        %v1515 = vld [vmem:[%s1514] sm:$0xff]
        %v1518 = vunpack.c.l.s4 1966171168
        %v1519 = vunpack.c.0.s8 %v1518
        %v1520 = vlaneseq
        %v1521 = vshrl.u32 %v1520, 7
        %v1522 = vsub.s32 %v1519, %v1521
        %v1523 = vrot.slane %v1513, %v1522
        %v1524 = vcombine.high %v1523, %v1523
        %v1526 = vunpack.c.l.s4 1966171168
        %v1527 = vunpack.c.0.s8 %v1526
        %v1528 = vlaneseq
        %v1529 = vshrl.u32 %v1528, 7
        %v1530 = vsub.s32 %v1527, %v1529
        %v1531 = vrot.slane %v1523, %v1530
        %v1533 = vunpack.c.l.s4 1966171168
        %v1534 = vunpack.c.0.s8 %v1533
        %v1535 = vlaneseq
        %v1536 = vshrl.u32 %v1535, 7
        %v1537 = vsub.s32 %v1534, %v1536
        %v1538 = vrot.slane %v1524, %v1537
        %v1539 = vlaneseq
        %v1540 = vshrl.u32 %v1539, 7
        %v1541 = vsub.s32 0, %v1540
        %v1542 = vrot.slane %v1531, %v1541
        %v1543 = vlaneseq
        %v1544 = vshrl.u32 %v1543, 7
        %v1545 = vsub.s32 0, %v1544
        %v1546 = vrot.slane %v1538, %v1545
        %v1549 = vmul.f32 %v1542, %v1515
        %v1550 = vmul.f32 %v1546, %v1515
        %v1551 = vadd.f32 %v1510, %v1549
        %v1552 = vadd.f32 %v1511, %v1550
        %s1553 = scalar_lea.vmem %s232, 62 [#allocation2]
        %v1554 = vld [vmem:[%s1553] sm:$0x3]
        %s1555 = scalar_lea.vmem %s241, 248 [#allocation5]
        %v1556 = vld [vmem:[%s1555] sm:$0xff]
        %v1559 = vunpack.c.l.s4 1966171168
        %v1560 = vunpack.c.0.s8 %v1559
        %v1561 = vlaneseq
        %v1562 = vshrl.u32 %v1561, 7
        %v1563 = vsub.s32 %v1560, %v1562
        %v1564 = vrot.slane %v1554, %v1563
        %v1565 = vcombine.high %v1564, %v1564
        %v1567 = vunpack.c.l.s4 1966171168
        %v1568 = vunpack.c.0.s8 %v1567
        %v1569 = vlaneseq
        %v1570 = vshrl.u32 %v1569, 7
        %v1571 = vsub.s32 %v1568, %v1570
        %v1572 = vrot.slane %v1564, %v1571
        %v1574 = vunpack.c.l.s4 1966171168
        %v1575 = vunpack.c.0.s8 %v1574
        %v1576 = vlaneseq
        %v1577 = vshrl.u32 %v1576, 7
        %v1578 = vsub.s32 %v1575, %v1577
        %v1579 = vrot.slane %v1565, %v1578
        %v1580 = vlaneseq
        %v1581 = vshrl.u32 %v1580, 7
        %v1582 = vsub.s32 0, %v1581
        %v1583 = vrot.slane %v1572, %v1582
        %v1584 = vlaneseq
        %v1585 = vshrl.u32 %v1584, 7
        %v1586 = vsub.s32 0, %v1585
        %v1587 = vrot.slane %v1579, %v1586
        %v1590 = vmul.f32 %v1583, %v1556
        %v1591 = vmul.f32 %v1587, %v1556
        %v1592 = vadd.f32 %v1551, %v1590
        %v1593 = vadd.f32 %v1552, %v1591
        %s1594 = scalar_lea.vmem %s232, 64 [#allocation2]
        %v1595 = vld [vmem:[%s1594] sm:$0x3]
        %s1596 = scalar_lea.vmem %s241, 256 [#allocation5]
        %v1597 = vld [vmem:[%s1596] sm:$0xff]
        %v1600 = vunpack.c.l.s4 1966171168
        %v1601 = vunpack.c.0.s8 %v1600
        %v1602 = vlaneseq
        %v1603 = vshrl.u32 %v1602, 7
        %v1604 = vsub.s32 %v1601, %v1603
        %v1605 = vrot.slane %v1595, %v1604
        %v1606 = vcombine.high %v1605, %v1605
        %v1608 = vunpack.c.l.s4 1966171168
        %v1609 = vunpack.c.0.s8 %v1608
        %v1610 = vlaneseq
        %v1611 = vshrl.u32 %v1610, 7
        %v1612 = vsub.s32 %v1609, %v1611
        %v1613 = vrot.slane %v1605, %v1612
        %v1615 = vunpack.c.l.s4 1966171168
        %v1616 = vunpack.c.0.s8 %v1615
        %v1617 = vlaneseq
        %v1618 = vshrl.u32 %v1617, 7
        %v1619 = vsub.s32 %v1616, %v1618
        %v1620 = vrot.slane %v1606, %v1619
        %v1621 = vlaneseq
        %v1622 = vshrl.u32 %v1621, 7
        %v1623 = vsub.s32 0, %v1622
        %v1624 = vrot.slane %v1613, %v1623
        %v1625 = vlaneseq
        %v1626 = vshrl.u32 %v1625, 7
        %v1627 = vsub.s32 0, %v1626
        %v1628 = vrot.slane %v1620, %v1627
        %v1631 = vmul.f32 %v1624, %v1597
        %v1632 = vmul.f32 %v1628, %v1597
        %v1633 = vadd.f32 %v1592, %v1631
        %v1634 = vadd.f32 %v1593, %v1632
        %s1635 = scalar_lea.vmem %s232, 66 [#allocation2]
        %v1636 = vld [vmem:[%s1635] sm:$0x3]
        %s1637 = scalar_lea.vmem %s241, 264 [#allocation5]
        %v1638 = vld [vmem:[%s1637] sm:$0xff]
        %v1641 = vunpack.c.l.s4 1966171168
        %v1642 = vunpack.c.0.s8 %v1641
        %v1643 = vlaneseq
        %v1644 = vshrl.u32 %v1643, 7
        %v1645 = vsub.s32 %v1642, %v1644
        %v1646 = vrot.slane %v1636, %v1645
        %v1647 = vcombine.high %v1646, %v1646
        %v1649 = vunpack.c.l.s4 1966171168
        %v1650 = vunpack.c.0.s8 %v1649
        %v1651 = vlaneseq
        %v1652 = vshrl.u32 %v1651, 7
        %v1653 = vsub.s32 %v1650, %v1652
        %v1654 = vrot.slane %v1646, %v1653
        %v1656 = vunpack.c.l.s4 1966171168
        %v1657 = vunpack.c.0.s8 %v1656
        %v1658 = vlaneseq
        %v1659 = vshrl.u32 %v1658, 7
        %v1660 = vsub.s32 %v1657, %v1659
        %v1661 = vrot.slane %v1647, %v1660
        %v1662 = vlaneseq
        %v1663 = vshrl.u32 %v1662, 7
        %v1664 = vsub.s32 0, %v1663
        %v1665 = vrot.slane %v1654, %v1664
        %v1666 = vlaneseq
        %v1667 = vshrl.u32 %v1666, 7
        %v1668 = vsub.s32 0, %v1667
        %v1669 = vrot.slane %v1661, %v1668
        %v1672 = vmul.f32 %v1665, %v1638
        %v1673 = vmul.f32 %v1669, %v1638
        %v1674 = vadd.f32 %v1633, %v1672
        %v1675 = vadd.f32 %v1634, %v1673
        %s1676 = scalar_lea.vmem %s232, 68 [#allocation2]
        %v1677 = vld [vmem:[%s1676] sm:$0x3]
        %s1678 = scalar_lea.vmem %s241, 272 [#allocation5]
        %v1679 = vld [vmem:[%s1678] sm:$0xff]
        %v1682 = vunpack.c.l.s4 1966171168
        %v1683 = vunpack.c.0.s8 %v1682
        %v1684 = vlaneseq
        %v1685 = vshrl.u32 %v1684, 7
        %v1686 = vsub.s32 %v1683, %v1685
        %v1687 = vrot.slane %v1677, %v1686
        %v1688 = vcombine.high %v1687, %v1687
        %v1690 = vunpack.c.l.s4 1966171168
        %v1691 = vunpack.c.0.s8 %v1690
        %v1692 = vlaneseq
        %v1693 = vshrl.u32 %v1692, 7
        %v1694 = vsub.s32 %v1691, %v1693
        %v1695 = vrot.slane %v1687, %v1694
        %v1697 = vunpack.c.l.s4 1966171168
        %v1698 = vunpack.c.0.s8 %v1697
        %v1699 = vlaneseq
        %v1700 = vshrl.u32 %v1699, 7
        %v1701 = vsub.s32 %v1698, %v1700
        %v1702 = vrot.slane %v1688, %v1701
        %v1703 = vlaneseq
        %v1704 = vshrl.u32 %v1703, 7
        %v1705 = vsub.s32 0, %v1704
        %v1706 = vrot.slane %v1695, %v1705
        %v1707 = vlaneseq
        %v1708 = vshrl.u32 %v1707, 7
        %v1709 = vsub.s32 0, %v1708
        %v1710 = vrot.slane %v1702, %v1709
        %v1713 = vmul.f32 %v1706, %v1679
        %v1714 = vmul.f32 %v1710, %v1679
        %v1715 = vadd.f32 %v1674, %v1713
        %v1716 = vadd.f32 %v1675, %v1714
        %s1717 = scalar_lea.vmem %s232, 70 [#allocation2]
        %v1718 = vld [vmem:[%s1717] sm:$0x3]
        %s1719 = scalar_lea.vmem %s241, 280 [#allocation5]
        %v1720 = vld [vmem:[%s1719] sm:$0xff]
        %v1723 = vunpack.c.l.s4 1966171168
        %v1724 = vunpack.c.0.s8 %v1723
        %v1725 = vlaneseq
        %v1726 = vshrl.u32 %v1725, 7
        %v1727 = vsub.s32 %v1724, %v1726
        %v1728 = vrot.slane %v1718, %v1727
        %v1729 = vcombine.high %v1728, %v1728
        %v1731 = vunpack.c.l.s4 1966171168
        %v1732 = vunpack.c.0.s8 %v1731
        %v1733 = vlaneseq
        %v1734 = vshrl.u32 %v1733, 7
        %v1735 = vsub.s32 %v1732, %v1734
        %v1736 = vrot.slane %v1728, %v1735
        %v1738 = vunpack.c.l.s4 1966171168
        %v1739 = vunpack.c.0.s8 %v1738
        %v1740 = vlaneseq
        %v1741 = vshrl.u32 %v1740, 7
        %v1742 = vsub.s32 %v1739, %v1741
        %v1743 = vrot.slane %v1729, %v1742
        %v1744 = vlaneseq
        %v1745 = vshrl.u32 %v1744, 7
        %v1746 = vsub.s32 0, %v1745
        %v1747 = vrot.slane %v1736, %v1746
        %v1748 = vlaneseq
        %v1749 = vshrl.u32 %v1748, 7
        %v1750 = vsub.s32 0, %v1749
        %v1751 = vrot.slane %v1743, %v1750
        %v1754 = vmul.f32 %v1747, %v1720
        %v1755 = vmul.f32 %v1751, %v1720
        %v1756 = vadd.f32 %v1715, %v1754
        %v1757 = vadd.f32 %v1716, %v1755
        %1758 = vst [vmem:[%s282] sm:$0xff] %v1756
        %1759 = vst [vmem:[%s282 + $0x8] sm:$0xff] %v1757
        %s1760 = sand.u32 %s127, 1
        %s1761 = scalar_lea.sflag [#allocation4], %s1760
        %s1762 = sand.u32 %s127, 1
        %s1763 = smul.addr %s1762, 16
        %s1764 = scalar_lea.vmem [#allocation8], %s1763
        // Predicated region
        $region45: #{tpu_custom_call.1} parent=31 // pred_check
          %p1765 = pneg %p137
        $region46: #{tpu_custom_call.1} parent=31 // pred_check_branch
          %1767 = sbr.rel (%p1765) target = $region48
        $region47: #{tpu_custom_call.1} parent=31 // pred_region
          %s1769 = ssub.s32 256, 256
          %1770 = vsyncadd %s1761, %s1769
          %s1771 = smul.addr %s28, 2
          %s1772 = sadd.s32 %s27, %s1771
          %s1773 = smul.addr %s1772, 128
          %s1774 = scalar_lea.hbm %s3, %s1773
          %s1775 = sshll.u32 %s1764, 4
          %s1776 = int_to_ptr.vmem [resolvable:$true] %s1775
          %1781 = dma.vmem_to_hbm [thread:$0]  %s1776, 256, %s1774, %s1761, 128, 256, 8
        $region48: #{tpu_custom_call.1} parent=31 // pred_fallthru
          _
      $region32: #{tpu_custom_call.1} parent=5 // pred_fallthru
        _
      %p1782 = scmp.le.s32.totalorder 2, %s18
      // Predicated region
      $region49: #{tpu_custom_call.1} parent=5 // pred_check
        %p1783 = pneg %p1782
      $region50: #{tpu_custom_call.1} parent=5 // pred_check_branch
        %1785 = sbr.rel (%p1783) target = $region52
      $region51: #{tpu_custom_call.1} parent=5 // pred_region
        %s1786 = ssub.s32 %s18, 2
        // Predicated region
        $region53: #{tpu_custom_call.1} parent=51 // pred_check
          %p1787 = pneg %p143
        $region54: #{tpu_custom_call.1} parent=51 // pred_check_branch
          %1789 = sbr.rel (%p1787) target = $region56
        $region55: #{tpu_custom_call.1} parent=51 // pred_region
          %s1790 = sand.u32 %s128, 1
          %s1791 = scalar_lea.sflag [#allocation4], %s1790
          %s1792 = sand.u32 %s128, 1
          %s1793 = smul.addr %s1792, 16
          %s1794 = scalar_lea.vmem [#allocation8], %s1793
          %1795 = dma.done %s1791, 256
        $region56: #{tpu_custom_call.1} parent=51 // pred_fallthru
          _
      $region52: #{tpu_custom_call.1} parent=5 // pred_fallthru
        _
    $region6: #{tpu_custom_call.1} parent=1 // loop_footer
      %s22 = sadd.s32 1, %s18
    $region7: #{tpu_custom_call.1} parent=1 // loop_footer_branch
      %17 = sbr.rel target = $region3
    $region8: #{tpu_custom_call.1} parent=1 // loop_exit
      _
    %1796 = vsyncpa [#allocation3], 1
    %s1797 = scalar_lea.sflag [#allocation3], 1
    %1798 = vsyncpa %s1797, 1
    %1799 = vsyncpa [#allocation6], 1
    %s1800 = scalar_lea.sflag [#allocation6], 1
    %1801 = vsyncpa %s1800, 1
    %1802 = vsyncpa [#allocation4], 1
    %s1803 = scalar_lea.sflag [#allocation4], 1
    %1804 = vsyncpa %s1803, 1

</llo_original>
